<compile_context>
chip_gen: v7x
topology: tpu7x:2x2x1
jax: 0.10.0
libtpu: 0.0.40
codegen_flags: <defaults>
</compile_context>

<pallas_src>
import jax
import jax.numpy as jnp
import numpy as np
from jax import lax
from jax.experimental import pallas as pl
from jax.experimental.pallas import tpu as pltpu


def _round_up(x, m):
    return (x + m - 1) // m * m


def _pad2d(a, rows, cols):
    r, c = a.shape
    return jnp.pad(a, ((0, rows - r), (0, cols - c)))


def _conv_as_matmul_weight(w_oihw, stride, pad, in_hw):
    """Exact dense W such that, with NCHW flattening on both sides,
    x.reshape(B, -1) @ W == conv2d(x, w, stride, padding=pad).reshape(B, -1).
    Built by index scatter in numpy at init time (no arithmetic -> exact)."""
    w = np.asarray(w_oihw, np.float32)
    co, ci, kh, kw = w.shape
    ih, iw = in_hw
    oh = (ih - kh + 2 * pad) // stride + 1
    ow = (iw - kw + 2 * pad) // stride + 1
    W = np.zeros((ci * ih * iw, co * oh * ow), np.float32)
    for o in range(co):
        for y in range(oh):
            for x in range(ow):
                col = (o * oh + y) * ow + x
                for c in range(ci):
                    for dy in range(kh):
                        yy = y * stride - pad + dy
                        if yy < 0 or yy >= ih:
                            continue
                        for dx in range(kw):
                            xx = x * stride - pad + dx
                            if xx < 0 or xx >= iw:
                                continue
                            row = (c * ih + yy) * iw + xx
                            W[row, col] = w[o, c, dy, dx]
    return jnp.asarray(W)


# ---------------------------------------------------------------------------
# Pallas kernel: fully fused 4-layer (matmul + bias [+ ReLU]) chain.
# Matmuls run in the weights' dtype (bf16 by default) with f32 accumulation;
# bias-add / ReLU are done in f32.  All operands live in VMEM.
# ---------------------------------------------------------------------------
def _fused_forward_kernel(x_ref, w1_ref, w2_ref, w3_ref, w4_ref, b_ref, o_ref):
    cdt = w1_ref.dtype
    d1 = w1_ref.shape[1]
    d2 = w2_ref.shape[1]
    d3 = w3_ref.shape[1]
    d4 = w4_ref.shape[1]

    h = jnp.dot(x_ref[...], w1_ref[...], preferred_element_type=jnp.float32)
    h = jnp.maximum(h + b_ref[0:1, 0:d1], 0.0)                       # conv1+ReLU
    h = jnp.dot(h.astype(cdt), w2_ref[...], preferred_element_type=jnp.float32)
    h = jnp.maximum(h + b_ref[1:2, 0:d2], 0.0)                       # conv2+ReLU
    h = jnp.dot(h.astype(cdt), w3_ref[...], preferred_element_type=jnp.float32)
    h = jnp.maximum(h + b_ref[2:3, 0:d3], 0.0)                       # fc1+ReLU
    o_ref[...] = (
        jnp.dot(h.astype(cdt), w4_ref[...], preferred_element_type=jnp.float32)
        + b_ref[3:4, 0:d4]
    ).astype(o_ref.dtype)                                            # fc2


# ---------------------------------------------------------------------------
# Model
# ---------------------------------------------------------------------------
class CriticConvBigPallas:
    def __init__(self, input_height, input_width, channel1, channel2, key,
                 max_tile_b=1024, min_parallel_tiles=2, use_bf16=True):
        self.channel1 = channel1
        self.channel2 = channel2
        self.input_height = input_height
        self.input_width = input_width
        self.max_tile_b = max(8, max_tile_b)
        self.min_parallel_tiles = max(1, min_parallel_tiles)
        self.compute_dtype = jnp.bfloat16 if use_bf16 else jnp.float32
        self.k_s1, self.s1, self.p1 = 4, 2, 2
        self.k_s2, self.s2, self.p2 = 2, 1, 1

        self.h1 = (input_height - self.k_s1 + 2 * self.p1) // self.s1 + 1
        self.w1 = (input_width - self.k_s1 + 2 * self.p1) // self.s1 + 1
        self.h2 = (self.h1 - self.k_s2 + 2 * self.p2) // self.s2 + 1
        self.w2 = (self.w1 - self.k_s2 + 2 * self.p2) // self.s2 + 1
        self.fc_in_size = channel2 * self.h2 * self.w2

        k1, k2, k3, k4 = jax.random.split(key, 4)
        std = 0.01
        # PyTorch param layout: conv weight (Cout, Cin, kh, kw), fc weight (out, in).
        params = dict(
            w_conv1=std * jax.random.normal(k1, (channel1, 1, 4, 4), jnp.float32),
            b_conv1=jnp.zeros((channel1,), jnp.float32),
            w_conv2=std * jax.random.normal(k2, (channel2, channel1, 2, 2), jnp.float32),
            b_conv2=jnp.zeros((channel2,), jnp.float32),
            w_fc1=std * jax.random.normal(k3, (20, self.fc_in_size), jnp.float32),
            b_fc1=jnp.zeros((20,), jnp.float32),
            w_fc2=std * jax.random.normal(k4, (1, 20), jnp.float32),
            b_fc2=jnp.zeros((1,), jnp.float32),
        )
        self.set_torch_params(params)

    # Rebuild the fused / padded kernel parameters from PyTorch-layout params.
    def set_torch_params(self, params):
        self.params = {k: jnp.asarray(v, jnp.float32) for k, v in params.items()}
        p = self.params

        d0 = 1 * self.input_height * self.input_width
        d1 = self.channel1 * self.h1 * self.w1
        d2 = self.channel2 * self.h2 * self.w2
        d3 = 20
        d4 = 1
        self.d0, self.d1, self.d2, self.d3, self.d4 = d0, d1, d2, d3, d4
        self.d0p = _round_up(d0, 128)
        self.d1p = _round_up(d1, 128)   # 324 -> 384 (3 MXU passes on v5e, not 4)
        self.d2p = _round_up(d2, 128)
        self.d3p = _round_up(d3, 128)
        self.d4p = _round_up(d4, 128)

        # Exact dense lowering of the convs (stride/pad/NCHW-flatten baked in).
        w1_eff = _conv_as_matmul_weight(p["w_conv1"], self.s1, self.p1,
                                        (self.input_height, self.input_width))
        w2_eff = _conv_as_matmul_weight(p["w_conv2"], self.s2, self.p2,
                                        (self.h1, self.w1))
        w3 = p["w_fc1"].T                       # (fc_in, 20), NCHW row order
        w4 = p["w_fc2"].T                       # (20, 1)

        # Lane-pad to multiples of 128, store in the MXU compute dtype (bf16).
        cdt = self.compute_dtype
        self.w1p = _pad2d(w1_eff, self.d0p, self.d1p).astype(cdt)
        self.w2p = _pad2d(w2_eff, self.d1p, self.d2p).astype(cdt)
        self.w3p = _pad2d(w3, self.d2p, self.d3p).astype(cdt)
        self.w4p = _pad2d(w4, self.d3p, self.d4p).astype(cdt)

        # Per-layer biases, broadcast to the flattened (NCHW) layout, packed
        # into a single sublane-8-aligned f32 tile (row i = layer i's bias).
        b1 = jnp.repeat(p["b_conv1"], self.h1 * self.w1)
        b2 = jnp.repeat(p["b_conv2"], self.h2 * self.w2)
        b3 = p["b_fc1"]
        b4 = p["b_fc2"]
        self.bias_cols = max(self.d1p, self.d2p, self.d3p, self.d4p)
        bias_pack = jnp.zeros((8, self.bias_cols), jnp.float32)
        bias_pack = bias_pack.at[0, :d1].set(b1)
        bias_pack = bias_pack.at[1, :d2].set(b2)
        bias_pack = bias_pack.at[2, :d3].set(b3)
        bias_pack = bias_pack.at[3, :d4].set(b4)
        self.bias_pack = bias_pack

    def _tiling(self, B):
        # Number of batch tiles: enough to respect max_tile_b, and >= 2 when
        # the batch is worth splitting (both v7x TensorCores get work via the
        # "parallel" grid axis; on single-TC v5e/v6e the extra step costs
        # ~0.35us — negligible).  Padding never exceeds 7 rows per tile.
        nm = max(1, pl.cdiv(B, self.max_tile_b))
        if B > 16:
            nm = max(nm, self.min_parallel_tiles)
        tile_b = _round_up(pl.cdiv(B, nm), 8)
        b_pad = nm * tile_b
        return nm, tile_b, b_pad

    def __call__(self, x):
        # x: (B, 1, H, W) NCHW, like PyTorch.
        B = x.shape[0]
        x_flat = x.reshape(B, -1).astype(self.compute_dtype)   # NCHW flatten (Cin=1)

        nm, tile_b, b_pad = self._tiling(B)
        x_flat = jnp.pad(x_flat,
                         ((0, b_pad - B), (0, self.d0p - x_flat.shape[1])))

        in_bytes = jnp.dtype(self.compute_dtype).itemsize
        w_elems = (self.d0p * self.d1p + self.d1p * self.d2p
                   + self.d2p * self.d3p + self.d3p * self.d4p)
        flops = 2 * b_pad * w_elems
        bytes_accessed = (in_bytes * (b_pad * self.d0p + w_elems)
                          + 4 * (b_pad * self.d4p + 8 * self.bias_cols))

        out = pl.pallas_call(
            _fused_forward_kernel,
            out_shape=jax.ShapeDtypeStruct((b_pad, self.d4p), jnp.float32),
            grid=(nm,),
            in_specs=[
                pl.BlockSpec((tile_b, self.d0p), lambda i: (i, 0)),
                # Grid-invariant operands (constant index_map -> DMA'd once).
                pl.BlockSpec((self.d0p, self.d1p), lambda i: (0, 0)),
                pl.BlockSpec((self.d1p, self.d2p), lambda i: (0, 0)),
                pl.BlockSpec((self.d2p, self.d3p), lambda i: (0, 0)),
                pl.BlockSpec((self.d3p, self.d4p), lambda i: (0, 0)),
                pl.BlockSpec((8, self.bias_cols), lambda i: (0, 0)),
            ],
            out_specs=pl.BlockSpec((tile_b, self.d4p), lambda i: (i, 0)),
            compiler_params=pltpu.CompilerParams(
                dimension_semantics=("parallel",),
                vmem_limit_bytes=32 * 1024 * 1024),
            cost_estimate=pl.CostEstimate(
                flops=flops, transcendentals=0, bytes_accessed=bytes_accessed),
        )(x_flat, self.w1p, self.w2p, self.w3p, self.w4p, self.bias_pack)

        return out[:B, :1]


# ---------------------------------------------------------------------------
# Pure-JAX f32 reference (for correctness check)
# ---------------------------------------------------------------------------
def reference_forward(params, x):
    dn = ("NCHW", "OIHW", "NCHW")
    y = lax.conv_general_dilated(x, params["w_conv1"], (2, 2), [(2, 2), (2, 2)],
                                 dimension_numbers=dn)
    y = jax.nn.relu(y + params["b_conv1"][None, :, None, None])
    y = lax.conv_general_dilated(y, params["w_conv2"], (1, 1), [(1, 1), (1, 1)],
                                 dimension_numbers=dn)
    y = jax.nn.relu(y + params["b_conv2"][None, :, None, None])
    flat = y.reshape(y.shape[0], -1)                     # NCHW flatten
    h = jax.nn.relu(flat @ params["w_fc1"].T + params["b_fc1"])
    return h @ params["w_fc2"].T + params["b_fc2"]


if __name__ == "__main__":
    key = jax.random.PRNGKey(0)
    k_param, k_x, k_x2, kb1, kb2, kb3, kb4 = jax.random.split(key, 7)

    B, H, W = 2, 16, 16
    channel1, channel2 = 4, 4
    model = CriticConvBigPallas(H, W, channel1, channel2, k_param)

    # Test-only: give the biases non-zero values so the bias path is exercised
    # (the PyTorch module inits them to 0, which would make the check trivial).
    params = dict(model.params)
    params["b_conv1"] = 0.01 * jax.random.normal(kb1, (channel1,), jnp.float32)
    params["b_conv2"] = 0.01 * jax.random.normal(kb2, (channel2,), jnp.float32)
    params["b_fc1"] = 0.01 * jax.random.normal(kb3, (20,), jnp.float32)
    params["b_fc2"] = 0.01 * jax.random.normal(kb4, (1,), jnp.float32)
    model.set_torch_params(params)

    fwd = jax.jit(model.__call__)

    # bf16 MXU path -> tolerance-equal (weights are O(0.01), so rel err ~1e-3).
    ATOL, RTOL = 1e-3, 2e-2

    # Small batch (single tile).
    x = jax.random.normal(k_x, (B, 1, H, W), jnp.float32)
    v = jax.block_until_ready(fwd(x))
    v_ref = jax.block_until_ready(reference_forward(model.params, x))
    assert v.shape == (B, 1), v.shape
    err = float(np.abs(np.asarray(v, np.float32) - np.asarray(v_ref)).max())
    assert np.allclose(np.asarray(v, np.float32), np.asarray(v_ref),
                       atol=ATOL, rtol=RTOL), err

    # Awkward batch (exercises the multi-tile "parallel" grid path: nm=2).
    B2 = 70
    x2 = jax.random.normal(k_x2, (B2, 1, H, W), jnp.float32)
    v2 = jax.block_until_ready(jax.jit(model.__call__)(x2))
    v2_ref = jax.block_until_ready(reference_forward(model.params, x2))
    assert v2.shape == (B2, 1), v2.shape
    err2 = float(np.abs(np.asarray(v2, np.float32) - np.asarray(v2_ref)).max())
    assert np.allclose(np.asarray(v2, np.float32), np.asarray(v2_ref),
                       atol=ATOL, rtol=RTOL), err2

    print("KERNEL_OK")
</pallas_src>

<mosaic_0001>
module attributes {stable_mosaic.version = 11 : i64} {
  func.func @_fused_forward_kernel(%arg0: i32, %arg1: memref<8x256xbf16, #tpu.memory_space<vmem>>, %arg2: memref<256x384xbf16, #tpu.memory_space<vmem>>, %arg3: memref<384x512xbf16, #tpu.memory_space<vmem>>, %arg4: memref<512x128xbf16, #tpu.memory_space<vmem>>, %arg5: memref<128x128xbf16, #tpu.memory_space<vmem>>, %arg6: memref<8x512xf32, #tpu.memory_space<vmem>>, %arg7: memref<8x128xf32, #tpu.memory_space<vmem>>) attributes {dimension_semantics = [#tpu.dimension_semantics<parallel>], iteration_bounds = array<i64: 1>, scalar_prefetch = 0 : i64, scratch_operands = 0 : i64, tpu.core_type = #tpu.core_type<tc>, window_params = [{transform_indices = @transform_0, window_bounds = array<i64: 8, 256>}, {pipeline_mode = #tpu.pipeline_mode<synchronous>, transform_indices = @transform_1, window_bounds = array<i64: 256, 384>}, {pipeline_mode = #tpu.pipeline_mode<synchronous>, transform_indices = @transform_2, window_bounds = array<i64: 384, 512>}, {pipeline_mode = #tpu.pipeline_mode<synchronous>, transform_indices = @transform_3, window_bounds = array<i64: 512, 128>}, {pipeline_mode = #tpu.pipeline_mode<synchronous>, transform_indices = @transform_4, window_bounds = array<i64: 128, 128>}, {pipeline_mode = #tpu.pipeline_mode<synchronous>, transform_indices = @transform_5, window_bounds = array<i64: 8, 512>}, {transform_indices = @transform_6, window_bounds = array<i64: 8, 128>}]} {
    %c0 = arith.constant 0 : index
    %c0_0 = arith.constant 0 : index
    %0 = vector.load %arg1[%c0, %c0_0] : memref<8x256xbf16, #tpu.memory_space<vmem>>, vector<8x256xbf16>
    %c0_1 = arith.constant 0 : index
    %c0_2 = arith.constant 0 : index
    %1 = vector.load %arg2[%c0_1, %c0_2] : memref<256x384xbf16, #tpu.memory_space<vmem>>, vector<256x384xbf16>
    %cst = arith.constant dense<0.000000e+00> : vector<8x384xf32>
    %2 = tpu.matmul %0, %1, %cst {dimension_numbers = #tpu.dot_dimension_numbers<[1], [0], [0], [1], [0, 0, 1, 1], [], []>} : vector<8x256xbf16>, vector<256x384xbf16>, vector<8x384xf32> -> vector<8x384xf32>
    %c0_3 = arith.constant 0 : index
    %c0_4 = arith.constant 0 : index
    %3 = vector.load %arg6[%c0_3, %c0_4] : memref<8x512xf32, #tpu.memory_space<vmem>>, vector<1x384xf32>
    %4 = vector.broadcast %3 : vector<1x384xf32> to vector<8x384xf32>
    %5 = arith.addf %2, %4 : vector<8x384xf32>
    %cst_5 = arith.constant 0.000000e+00 : f32
    %6 = vector.broadcast %cst_5 : f32 to vector<8x384xf32>
    %7 = arith.maximumf %5, %6 : vector<8x384xf32>
    %8 = arith.truncf %7 : vector<8x384xf32> to vector<8x384xbf16>
    %c0_6 = arith.constant 0 : index
    %c0_7 = arith.constant 0 : index
    %9 = vector.load %arg3[%c0_6, %c0_7] : memref<384x512xbf16, #tpu.memory_space<vmem>>, vector<384x512xbf16>
    %cst_8 = arith.constant dense<0.000000e+00> : vector<8x512xf32>
    %10 = tpu.matmul %8, %9, %cst_8 {dimension_numbers = #tpu.dot_dimension_numbers<[1], [0], [0], [1], [0, 0, 1, 1], [], []>} : vector<8x384xbf16>, vector<384x512xbf16>, vector<8x512xf32> -> vector<8x512xf32>
    %c1 = arith.constant 1 : index
    %c0_9 = arith.constant 0 : index
    %11 = vector.load %arg6[%c1, %c0_9] : memref<8x512xf32, #tpu.memory_space<vmem>>, vector<1x512xf32>
    %12 = vector.broadcast %11 : vector<1x512xf32> to vector<8x512xf32>
    %13 = arith.addf %10, %12 : vector<8x512xf32>
    %cst_10 = arith.constant 0.000000e+00 : f32
    %14 = vector.broadcast %cst_10 : f32 to vector<8x512xf32>
    %15 = arith.maximumf %13, %14 : vector<8x512xf32>
    %16 = arith.truncf %15 : vector<8x512xf32> to vector<8x512xbf16>
    %c0_11 = arith.constant 0 : index
    %c0_12 = arith.constant 0 : index
    %17 = vector.load %arg4[%c0_11, %c0_12] : memref<512x128xbf16, #tpu.memory_space<vmem>>, vector<512x128xbf16>
    %cst_13 = arith.constant dense<0.000000e+00> : vector<8x128xf32>
    %18 = tpu.matmul %16, %17, %cst_13 {dimension_numbers = #tpu.dot_dimension_numbers<[1], [0], [0], [1], [0, 0, 1, 1], [], []>} : vector<8x512xbf16>, vector<512x128xbf16>, vector<8x128xf32> -> vector<8x128xf32>
    %c2 = arith.constant 2 : index
    %c0_14 = arith.constant 0 : index
    %19 = vector.load %arg6[%c2, %c0_14] : memref<8x512xf32, #tpu.memory_space<vmem>>, vector<1x128xf32>
    %20 = vector.broadcast %19 : vector<1x128xf32> to vector<8x128xf32>
    %21 = arith.addf %18, %20 : vector<8x128xf32>
    %cst_15 = arith.constant 0.000000e+00 : f32
    %22 = vector.broadcast %cst_15 : f32 to vector<8x128xf32>
    %23 = arith.maximumf %21, %22 : vector<8x128xf32>
    %24 = arith.truncf %23 : vector<8x128xf32> to vector<8x128xbf16>
    %c0_16 = arith.constant 0 : index
    %c0_17 = arith.constant 0 : index
    %25 = vector.load %arg5[%c0_16, %c0_17] : memref<128x128xbf16, #tpu.memory_space<vmem>>, vector<128x128xbf16>
    %cst_18 = arith.constant dense<0.000000e+00> : vector<8x128xf32>
    %26 = tpu.matmul %24, %25, %cst_18 {dimension_numbers = #tpu.dot_dimension_numbers<[1], [0], [0], [1], [0, 0, 1, 1], [], []>} : vector<8x128xbf16>, vector<128x128xbf16>, vector<8x128xf32> -> vector<8x128xf32>
    %c3 = arith.constant 3 : index
    %c0_19 = arith.constant 0 : index
    %27 = vector.load %arg6[%c3, %c0_19] : memref<8x512xf32, #tpu.memory_space<vmem>>, vector<1x128xf32>
    %28 = vector.broadcast %27 : vector<1x128xf32> to vector<8x128xf32>
    %29 = arith.addf %26, %28 : vector<8x128xf32>
    %c0_20 = arith.constant 0 : index
    %c0_21 = arith.constant 0 : index
    %30 = vector.load %arg7[%c0_20, %c0_21] : memref<8x128xf32, #tpu.memory_space<vmem>>, vector<8x128xf32>
    tpu.vector_store %arg7[%c0_20, %c0_21], %29 {strides = array<i32>} : memref<8x128xf32, #tpu.memory_space<vmem>>, vector<8x128xf32>,
    return
  }
  func.func @transform_0(%arg0: i32) -> (i32, i32) {
    %c0_i32 = arith.constant 0 : i32
    %c0_i32_0 = arith.constant 0 : i32
    return %arg0, %c0_i32 : i32, i32
  }
  func.func @transform_1(%arg0: i32) -> (i32, i32) {
    %c0_i32 = arith.constant 0 : i32
    %c0_i32_0 = arith.constant 0 : i32
    %c0_i32_1 = arith.constant 0 : i32
    return %c0_i32, %c0_i32_0 : i32, i32
  }
  func.func @transform_2(%arg0: i32) -> (i32, i32) {
    %c0_i32 = arith.constant 0 : i32
    %c0_i32_0 = arith.constant 0 : i32
    %c0_i32_1 = arith.constant 0 : i32
    return %c0_i32, %c0_i32_0 : i32, i32
  }
  func.func @transform_3(%arg0: i32) -> (i32, i32) {
    %c0_i32 = arith.constant 0 : i32
    %c0_i32_0 = arith.constant 0 : i32
    %c0_i32_1 = arith.constant 0 : i32
    return %c0_i32, %c0_i32_0 : i32, i32
  }
  func.func @transform_4(%arg0: i32) -> (i32, i32) {
    %c0_i32 = arith.constant 0 : i32
    %c0_i32_0 = arith.constant 0 : i32
    %c0_i32_1 = arith.constant 0 : i32
    return %c0_i32, %c0_i32_0 : i32, i32
  }
  func.func @transform_5(%arg0: i32) -> (i32, i32) {
    %c0_i32 = arith.constant 0 : i32
    %c0_i32_0 = arith.constant 0 : i32
    %c0_i32_1 = arith.constant 0 : i32
    return %c0_i32, %c0_i32_0 : i32, i32
  }
  func.func @transform_6(%arg0: i32) -> (i32, i32) {
    %c0_i32 = arith.constant 0 : i32
    %c0_i32_0 = arith.constant 0 : i32
    return %arg0, %c0_i32 : i32, i32
  }
}

</mosaic_0001>

<llo_original>
// kernel: a_call__.1
$region0: #{a_call__.1}
  #allocation0 [shape = 'u32[]', space=smem, size = 0x4, offset = 0x4, fixed_abs, tag = 'smem constant byte address 0x4 - core index']
  #allocation1 [shape = 'u32[144,128]{1,0:T(1,128)}', space=vmem, size = 0x12000, scoped, tag = 'internal scratch']
  %s0 = inlined_call_operand.vmem [shape: bf16[8,256], index: 0, kind: input, shape index: {}]
  %s1 = inlined_call_operand.vmem [shape: bf16[256,384], index: 1, kind: input, shape index: {}]
  %s2 = inlined_call_operand.vmem [shape: bf16[384,512], index: 2, kind: input, shape index: {}]
  %s3 = inlined_call_operand.vmem [shape: bf16[512,128], index: 3, kind: input, shape index: {}]
  %s4 = inlined_call_operand.vmem [shape: bf16[128,128], index: 4, kind: input, shape index: {}]
  %s5 = inlined_call_operand.vmem [shape: f32[8,512], index: 5, kind: input, shape index: {}]
  %s6 = inlined_call_operand.vmem [shape: f32[8,128], index: 6, kind: output, shape index: {}]
  %s7 = sld [smem:[#allocation0]]
  $region34: #{a_call__.1} parent=0
    _
  %s9 = ssub.s32 1, %s7
  %s10 = scalar_select 0, %s9, %s7
  // Predicated region
  $region2: #{a_call__.1} parent=0 // pred_check
    _
  $region3: #{a_call__.1} parent=0 // pred_check_branch
    %12 = sbr.rel (0) target = $region5
  $region4: #{a_call__.1} parent=0 // pred_region
    _
  $region5: #{a_call__.1} parent=0 // pred_fallthru
    _
  // Predicated region
  $region6: #{a_call__.1} parent=0 // pred_check
    _
  $region7: #{a_call__.1} parent=0 // pred_check_branch
    %14 = sbr.rel (0) target = $region9
  $region8: #{a_call__.1} parent=0 // pred_region
    _
  $region9: #{a_call__.1} parent=0 // pred_fallthru
    _
  // Predicated region
  $region10: #{a_call__.1} parent=0 // pred_check
    _
  $region11: #{a_call__.1} parent=0 // pred_check_branch
    %16 = sbr.rel (0) target = $region13
  $region12: #{a_call__.1} parent=0 // pred_region
    _
  $region13: #{a_call__.1} parent=0 // pred_fallthru
    _
  // Predicated region
  $region14: #{a_call__.1} parent=0 // pred_check
    _
  $region15: #{a_call__.1} parent=0 // pred_check_branch
    %18 = sbr.rel (0) target = $region17
  $region16: #{a_call__.1} parent=0 // pred_region
    _
  $region17: #{a_call__.1} parent=0 // pred_fallthru
    _
  // Predicated region
  $region18: #{a_call__.1} parent=0 // pred_check
    _
  $region19: #{a_call__.1} parent=0 // pred_check_branch
    %20 = sbr.rel (0) target = $region21
  $region20: #{a_call__.1} parent=0 // pred_region
    _
  $region21: #{a_call__.1} parent=0 // pred_fallthru
    _
  // Predicated region
  $region22: #{a_call__.1} parent=0 // pred_check
    _
  $region23: #{a_call__.1} parent=0 // pred_check_branch
    %22 = sbr.rel (0) target = $region25
  $region24: #{a_call__.1} parent=0 // pred_region
    _
  $region25: #{a_call__.1} parent=0 // pred_fallthru
    _
  %v24 = vld [vmem:[%s0] sm:$0xff]
  %v25 = vld [vmem:[%s1] sm:$0xff]
  %v26 = vld [vmem:[%s1 + $0x8] sm:$0xf]
  %v27 = vld [vmem:[%s1 + $0xc] sm:$0xff]
  %v28 = vld [vmem:[%s1 + $0x14] sm:$0xf]
  %v29 = vld [vmem:[%s1 + $0x18] sm:$0xff]
  %v30 = vld [vmem:[%s1 + $0x20] sm:$0xf]
  %v31 = vld [vmem:[%s1 + $0x24] sm:$0xff]
  %v32 = vld [vmem:[%s1 + $0x2c] sm:$0xf]
  %v33 = vld [vmem:[%s1 + $0x30] sm:$0xff]
  %v34 = vld [vmem:[%s1 + $0x38] sm:$0xf]
  %v35 = vld [vmem:[%s1 + $0x3c] sm:$0xff]
  %v36 = vld [vmem:[%s1 + $0x44] sm:$0xf]
  %v37 = vld [vmem:[%s1 + $0x48] sm:$0xff]
  %v38 = vld [vmem:[%s1 + $0x50] sm:$0xf]
  %v39 = vld [vmem:[%s1 + $0x54] sm:$0xff]
  %v40 = vld [vmem:[%s1 + $0x5c] sm:$0xf]
  %v41 = vld [vmem:[%s1 + $0x60] sm:$0xff]
  %v42 = vld [vmem:[%s1 + $0x68] sm:$0xf]
  %v43 = vld [vmem:[%s1 + $0x6c] sm:$0xff]
  %v44 = vld [vmem:[%s1 + $0x74] sm:$0xf]
  %v45 = vld [vmem:[%s1 + $0x78] sm:$0xff]
  %v46 = vld [vmem:[%s1 + $0x80] sm:$0xf]
  %v47 = vld [vmem:[%s1 + $0x84] sm:$0xff]
  %v48 = vld [vmem:[%s1 + $0x8c] sm:$0xf]
  %v49 = vld [vmem:[%s1 + $0x90] sm:$0xff]
  %v50 = vld [vmem:[%s1 + $0x98] sm:$0xf]
  %v51 = vld [vmem:[%s1 + $0x9c] sm:$0xff]
  %v52 = vld [vmem:[%s1 + $0xa4] sm:$0xf]
  %v53 = vld [vmem:[%s1 + $0xa8] sm:$0xff]
  %v54 = vld [vmem:[%s1 + $0xb0] sm:$0xf]
  %v55 = vld [vmem:[%s1 + $0xb4] sm:$0xff]
  %v56 = vld [vmem:[%s1 + $0xbc] sm:$0xf]
  %v57 = vld [vmem:[%s1 + $0xc0] sm:$0xff]
  %v58 = vld [vmem:[%s1 + $0xc8] sm:$0xf]
  %v59 = vld [vmem:[%s1 + $0xcc] sm:$0xff]
  %v60 = vld [vmem:[%s1 + $0xd4] sm:$0xf]
  %v61 = vld [vmem:[%s1 + $0xd8] sm:$0xff]
  %v62 = vld [vmem:[%s1 + $0xe0] sm:$0xf]
  %v63 = vld [vmem:[%s1 + $0xe4] sm:$0xff]
  %v64 = vld [vmem:[%s1 + $0xec] sm:$0xf]
  %v65 = vld [vmem:[%s1 + $0xf0] sm:$0xff]
  %v66 = vld [vmem:[%s1 + $0xf8] sm:$0xf]
  %v67 = vld [vmem:[%s1 + $0xfc] sm:$0xff]
  %v68 = vld [vmem:[%s1 + $0x104] sm:$0xf]
  %v69 = vld [vmem:[%s1 + $0x108] sm:$0xff]
  %v70 = vld [vmem:[%s1 + $0x110] sm:$0xf]
  %v71 = vld [vmem:[%s1 + $0x114] sm:$0xff]
  %v72 = vld [vmem:[%s1 + $0x11c] sm:$0xf]
  %v73 = vld [vmem:[%s1 + $0x120] sm:$0xff]
  %v74 = vld [vmem:[%s1 + $0x128] sm:$0xf]
  %v75 = vld [vmem:[%s1 + $0x12c] sm:$0xff]
  %v76 = vld [vmem:[%s1 + $0x134] sm:$0xf]
  %v77 = vld [vmem:[%s1 + $0x138] sm:$0xff]
  %v78 = vld [vmem:[%s1 + $0x140] sm:$0xf]
  %v79 = vld [vmem:[%s1 + $0x144] sm:$0xff]
  %v80 = vld [vmem:[%s1 + $0x14c] sm:$0xf]
  %v81 = vld [vmem:[%s1 + $0x150] sm:$0xff]
  %v82 = vld [vmem:[%s1 + $0x158] sm:$0xf]
  %v83 = vld [vmem:[%s1 + $0x15c] sm:$0xff]
  %v84 = vld [vmem:[%s1 + $0x164] sm:$0xf]
  %v85 = vld [vmem:[%s1 + $0x168] sm:$0xff]
  %v86 = vld [vmem:[%s1 + $0x170] sm:$0xf]
  %v87 = vld [vmem:[%s1 + $0x174] sm:$0xff]
  %v88 = vld [vmem:[%s1 + $0x17c] sm:$0xf]
  %v89 = vld [vmem:[%s5] ss:$8 sm:$0x7]
  %v91 = vlaneseq
  %v92 = vshrl.u32 %v91, 7
  %v93 = vsub.s32 0, %v92
  %v94 = vrot.slane %v89, %v93
  %v95 = vlaneseq
  %v96 = vshrl.u32 %v95, 7
  %v97 = vsub.s32 1, %v96
  %v98 = vrot.slane %v89, %v97
  %v99 = vlaneseq
  %v100 = vshrl.u32 %v99, 7
  %v101 = vsub.s32 2, %v100
  %v102 = vrot.slane %v89, %v101
  %v107 = vunpack.c.l.b16 %v24
  %v108 = vunpack.c.h.b16 %v24
  %v109 = vpack.c.b16 %v107, %v107
  %v110 = vpack.c.b16 %v108, %v108
  %v177 = vunpack.c.l.b16 %v25
  %v178 = vunpack.c.h.b16 %v25
  %v179 = vunpack.c.l.b16 %v26
  %v180 = vunpack.c.l.b16 %v27
  %v181 = vunpack.c.h.b16 %v27
  %v182 = vunpack.c.l.b16 %v28
  %v183 = vunpack.c.l.b16 %v29
  %v184 = vunpack.c.h.b16 %v29
  %v185 = vunpack.c.l.b16 %v30
  %v186 = vunpack.c.l.b16 %v31
  %v187 = vunpack.c.h.b16 %v31
  %v188 = vunpack.c.l.b16 %v32
  %v189 = vunpack.c.l.b16 %v33
  %v190 = vunpack.c.h.b16 %v33
  %v191 = vunpack.c.l.b16 %v34
  %v192 = vunpack.c.l.b16 %v35
  %v193 = vunpack.c.h.b16 %v35
  %v194 = vunpack.c.l.b16 %v36
  %v195 = vunpack.c.l.b16 %v37
  %v196 = vunpack.c.h.b16 %v37
  %v197 = vunpack.c.l.b16 %v38
  %v198 = vunpack.c.l.b16 %v39
  %v199 = vunpack.c.h.b16 %v39
  %v200 = vunpack.c.l.b16 %v40
  %v201 = vunpack.c.l.b16 %v41
  %v202 = vunpack.c.h.b16 %v41
  %v203 = vunpack.c.l.b16 %v42
  %v204 = vunpack.c.l.b16 %v43
  %v205 = vunpack.c.h.b16 %v43
  %v206 = vunpack.c.l.b16 %v44
  %v207 = vunpack.c.l.b16 %v45
  %v208 = vunpack.c.h.b16 %v45
  %v209 = vunpack.c.l.b16 %v46
  %v210 = vunpack.c.l.b16 %v47
  %v211 = vunpack.c.h.b16 %v47
  %v212 = vunpack.c.l.b16 %v48
  %v213 = vunpack.c.l.b16 %v49
  %v214 = vunpack.c.h.b16 %v49
  %v215 = vunpack.c.l.b16 %v50
  %v216 = vunpack.c.l.b16 %v51
  %v217 = vunpack.c.h.b16 %v51
  %v218 = vunpack.c.l.b16 %v52
  %v219 = vunpack.c.l.b16 %v53
  %v220 = vunpack.c.h.b16 %v53
  %v221 = vunpack.c.l.b16 %v54
  %v222 = vunpack.c.l.b16 %v55
  %v223 = vunpack.c.h.b16 %v55
  %v224 = vunpack.c.l.b16 %v56
  %v225 = vunpack.c.l.b16 %v57
  %v226 = vunpack.c.h.b16 %v57
  %v227 = vunpack.c.l.b16 %v58
  %v228 = vunpack.c.l.b16 %v59
  %v229 = vunpack.c.h.b16 %v59
  %v230 = vunpack.c.l.b16 %v60
  %v231 = vunpack.c.l.b16 %v61
  %v232 = vunpack.c.h.b16 %v61
  %v233 = vunpack.c.l.b16 %v62
  %v234 = vunpack.c.l.b16 %v63
  %v235 = vunpack.c.h.b16 %v63
  %v236 = vunpack.c.l.b16 %v64
  %v237 = vunpack.c.l.b16 %v65
  %v238 = vunpack.c.h.b16 %v65
  %v239 = vunpack.c.l.b16 %v66
  %v240 = vunpack.c.l.b16 %v67
  %v241 = vunpack.c.h.b16 %v67
  %v242 = vunpack.c.l.b16 %v68
  %v243 = vunpack.c.l.b16 %v69
  %v244 = vunpack.c.h.b16 %v69
  %v245 = vunpack.c.l.b16 %v70
  %v246 = vunpack.c.l.b16 %v71
  %v247 = vunpack.c.h.b16 %v71
  %v248 = vunpack.c.l.b16 %v72
  %v249 = vunpack.c.l.b16 %v73
  %v250 = vunpack.c.h.b16 %v73
  %v251 = vunpack.c.l.b16 %v74
  %v252 = vunpack.c.l.b16 %v75
  %v253 = vunpack.c.h.b16 %v75
  %v254 = vunpack.c.l.b16 %v76
  %v255 = vunpack.c.l.b16 %v77
  %v256 = vunpack.c.h.b16 %v77
  %v257 = vunpack.c.l.b16 %v78
  %v258 = vunpack.c.l.b16 %v79
  %v259 = vunpack.c.h.b16 %v79
  %v260 = vunpack.c.l.b16 %v80
  %v261 = vunpack.c.l.b16 %v81
  %v262 = vunpack.c.h.b16 %v81
  %v263 = vunpack.c.l.b16 %v82
  %v264 = vunpack.c.l.b16 %v83
  %v265 = vunpack.c.h.b16 %v83
  %v266 = vunpack.c.l.b16 %v84
  %v267 = vunpack.c.l.b16 %v85
  %v268 = vunpack.c.h.b16 %v85
  %v269 = vunpack.c.l.b16 %v86
  %v270 = vunpack.c.l.b16 %v87
  %v271 = vunpack.c.h.b16 %v87
  %v272 = vunpack.c.l.b16 %v88
  %v273 = vpack.c.b16 %v180, %v177
  %v274 = vpack.c.b16 %v181, %v178
  %v275 = vpack.c.b16 %v182, %v179
  %v276 = vpack.c.b16 %v186, %v183
  %v277 = vpack.c.b16 %v187, %v184
  %v278 = vpack.c.b16 %v188, %v185
  %v279 = vpack.c.b16 %v192, %v189
  %v280 = vpack.c.b16 %v193, %v190
  %v281 = vpack.c.b16 %v194, %v191
  %v282 = vpack.c.b16 %v198, %v195
  %v283 = vpack.c.b16 %v199, %v196
  %v284 = vpack.c.b16 %v200, %v197
  %v285 = vpack.c.b16 %v204, %v201
  %v286 = vpack.c.b16 %v205, %v202
  %v287 = vpack.c.b16 %v206, %v203
  %v288 = vpack.c.b16 %v210, %v207
  %v289 = vpack.c.b16 %v211, %v208
  %v290 = vpack.c.b16 %v212, %v209
  %v291 = vpack.c.b16 %v216, %v213
  %v292 = vpack.c.b16 %v217, %v214
  %v293 = vpack.c.b16 %v218, %v215
  %v294 = vpack.c.b16 %v222, %v219
  %v295 = vpack.c.b16 %v223, %v220
  %v296 = vpack.c.b16 %v224, %v221
  %v297 = vpack.c.b16 %v228, %v225
  %v298 = vpack.c.b16 %v229, %v226
  %v299 = vpack.c.b16 %v230, %v227
  %v300 = vpack.c.b16 %v234, %v231
  %v301 = vpack.c.b16 %v235, %v232
  %v302 = vpack.c.b16 %v236, %v233
  %v303 = vpack.c.b16 %v240, %v237
  %v304 = vpack.c.b16 %v241, %v238
  %v305 = vpack.c.b16 %v242, %v239
  %v306 = vpack.c.b16 %v246, %v243
  %v307 = vpack.c.b16 %v247, %v244
  %v308 = vpack.c.b16 %v248, %v245
  %v309 = vpack.c.b16 %v252, %v249
  %v310 = vpack.c.b16 %v253, %v250
  %v311 = vpack.c.b16 %v254, %v251
  %v312 = vpack.c.b16 %v258, %v255
  %v313 = vpack.c.b16 %v259, %v256
  %v314 = vpack.c.b16 %v260, %v257
  %v315 = vpack.c.b16 %v264, %v261
  %v316 = vpack.c.b16 %v265, %v262
  %v317 = vpack.c.b16 %v266, %v263
  %v318 = vpack.c.b16 %v270, %v267
  %v319 = vpack.c.b16 %v271, %v268
  %v320 = vpack.c.b16 %v272, %v269
  %369 = vmatprep.subr.bf16.mxu0 %v274
  %370 = vmatpush1.bf16.msra.mxu0 %v273
  %371 = vmatprep.subr.bf16.mxu0 %v277
  %372 = vmatpush1.bf16.msra.mxu0 %v276
  %373 = vmatprep.subr.bf16.mxu0 %v280
  %374 = vmatpush1.bf16.msra.mxu0 %v279
  %375 = vmatprep.subr.bf16.mxu0 %v283
  %376 = vmatpush1.bf16.msra.mxu0 %v282
  %377 = vmatprep.subr.bf16.mxu0 %v286
  %378 = vmatpush1.bf16.msra.mxu0 %v285
  %379 = vmatprep.subr.bf16.mxu0 %v289
  %380 = vmatpush1.bf16.msra.mxu0 %v288
  %381 = vmatprep.subr.bf16.mxu0 %v292
  %382 = vmatpush1.bf16.msra.mxu0 %v291
  %383 = vmatprep.subr.bf16.mxu0 %v295
  %384 = vmatpush1.bf16.msra.mxu0 %v294
  %385 = vmatprep.subr.bf16.mxu0 %v298
  %386 = vmatpush1.bf16.msra.mxu0 %v297
  %387 = vmatprep.subr.bf16.mxu0 %v301
  %388 = vmatpush1.bf16.msra.mxu0 %v300
  %389 = vmatprep.subr.bf16.mxu0 %v304
  %390 = vmatpush1.bf16.msra.mxu0 %v303
  %391 = vmatprep.subr.bf16.mxu0 %v307
  %392 = vmatpush1.bf16.msra.mxu0 %v306
  %393 = vmatprep.subr.bf16.mxu0 %v310
  %394 = vmatpush1.bf16.msra.mxu0 %v309
  %395 = vmatprep.subr.bf16.mxu0 %v313
  %396 = vmatpush1.bf16.msra.mxu0 %v312
  %397 = vmatprep.subr.bf16.mxu0 %v316
  %398 = vmatpush1.bf16.msra.mxu0 %v315
  %399 = vmatprep.subr.bf16.mxu0 %v319
  %400 = vmatpush1.bf16.msra.mxu0 %v318
  %401 = vmatprep.mubr.bf16.mxu0 %v110
  %402 = vmatmul.mubr.bf16.gmra.mrb[0].mxu0 %v109
  %v403 = vpop.f32.mrb[0].mxu0
  %v404 = vadd.f32 %v94, %v403
  %v405 = vpop.f32.mrb[0].mxu0
  %v406 = vadd.f32 %v98, %v405
  %v407 = vpop.f32.mrb[0].mxu0
  %v408 = vpop.f32.mrb[0].mxu0
  %409 = vdwg.mxu0
  %410 = vmatprep.subr.bf16.mxu0 0
  %411 = vmatpush1.bf16.msra.mxu0 %v275
  %412 = vmatprep.subr.bf16.mxu0 0
  %413 = vmatpush1.bf16.msra.mxu0 %v278
  %414 = vmatprep.subr.bf16.mxu0 0
  %415 = vmatpush1.bf16.msra.mxu0 %v281
  %416 = vmatprep.subr.bf16.mxu0 0
  %417 = vmatpush1.bf16.msra.mxu0 %v284
  %418 = vmatprep.subr.bf16.mxu0 0
  %419 = vmatpush1.bf16.msra.mxu0 %v287
  %420 = vmatprep.subr.bf16.mxu0 0
  %421 = vmatpush1.bf16.msra.mxu0 %v290
  %422 = vmatprep.subr.bf16.mxu0 0
  %423 = vmatpush1.bf16.msra.mxu0 %v293
  %424 = vmatprep.subr.bf16.mxu0 0
  %425 = vmatpush1.bf16.msra.mxu0 %v296
  %426 = vmatprep.subr.bf16.mxu0 0
  %427 = vmatpush1.bf16.msra.mxu0 %v299
  %428 = vmatprep.subr.bf16.mxu0 0
  %429 = vmatpush1.bf16.msra.mxu0 %v302
  %430 = vmatprep.subr.bf16.mxu0 0
  %431 = vmatpush1.bf16.msra.mxu0 %v305
  %432 = vmatprep.subr.bf16.mxu0 0
  %433 = vmatpush1.bf16.msra.mxu0 %v308
  %434 = vmatprep.subr.bf16.mxu0 0
  %435 = vmatpush1.bf16.msra.mxu0 %v311
  %436 = vmatprep.subr.bf16.mxu0 0
  %437 = vmatpush1.bf16.msra.mxu0 %v314
  %438 = vmatprep.subr.bf16.mxu0 0
  %439 = vmatpush1.bf16.msra.mxu0 %v317
  %440 = vmatprep.subr.bf16.mxu0 0
  %441 = vmatpush1.bf16.msra.mxu0 %v320
  %442 = vmatprep.mubr.bf16.mxu0 %v110
  %443 = vmatmul.mubr.bf16.gmra.mrb[0].mxu0 %v109
  %v444 = vpop.f32.mrb[0].mxu0
  %v445 = vadd.f32 %v102, %v444
  %v446 = vpop.f32.mrb[0].mxu0
  %v447 = vpop.f32.mrb[0].mxu0
  %v448 = vpop.f32.mrb[0].mxu0
  %449 = vdwg.mxu0
  %v450 = vmax.f32 %v404, 0.0
  %v451 = vmax.f32 %v406, 0.0
  %v452 = vmax.f32 %v445, 0.0
  %v453 = vpack.c.bf16 %v450, %v450
  %v454 = vpack.c.bf16 %v451, %v451
  %v455 = vpack.c.bf16 %v452, %v452
  %v456 = vld [vmem:[%s2] sm:$0xff]
  %v457 = vld [vmem:[%s2 + $0x8] sm:$0xff]
  %v458 = vld [vmem:[%s2 + $0x10] sm:$0xff]
  %v459 = vld [vmem:[%s2 + $0x18] sm:$0xff]
  %v460 = vld [vmem:[%s2 + $0x20] sm:$0xff]
  %v461 = vld [vmem:[%s2 + $0x28] sm:$0xff]
  %v462 = vld [vmem:[%s2 + $0x30] sm:$0xff]
  %v463 = vld [vmem:[%s2 + $0x38] sm:$0xff]
  %v464 = vld [vmem:[%s2 + $0x40] sm:$0xff]
  %v465 = vld [vmem:[%s2 + $0x48] sm:$0xff]
  %v466 = vld [vmem:[%s2 + $0x50] sm:$0xff]
  %v467 = vld [vmem:[%s2 + $0x58] sm:$0xff]
  %v468 = vld [vmem:[%s2 + $0x60] sm:$0xff]
  %v469 = vld [vmem:[%s2 + $0x68] sm:$0xff]
  %v470 = vld [vmem:[%s2 + $0x70] sm:$0xff]
  %v471 = vld [vmem:[%s2 + $0x78] sm:$0xff]
  %v472 = vld [vmem:[%s2 + $0x80] sm:$0xff]
  %v473 = vld [vmem:[%s2 + $0x88] sm:$0xff]
  %v474 = vld [vmem:[%s2 + $0x90] sm:$0xff]
  %v475 = vld [vmem:[%s2 + $0x98] sm:$0xff]
  %v476 = vld [vmem:[%s2 + $0xa0] sm:$0xff]
  %v477 = vld [vmem:[%s2 + $0xa8] sm:$0xff]
  %v478 = vld [vmem:[%s2 + $0xb0] sm:$0xff]
  %v479 = vld [vmem:[%s2 + $0xb8] sm:$0xff]
  %v480 = vld [vmem:[%s2 + $0xc0] sm:$0xff]
  %v481 = vld [vmem:[%s2 + $0xc8] sm:$0xff]
  %v482 = vld [vmem:[%s2 + $0xd0] sm:$0xff]
  %v483 = vld [vmem:[%s2 + $0xd8] sm:$0xff]
  %v484 = vld [vmem:[%s2 + $0xe0] sm:$0xff]
  %v485 = vld [vmem:[%s2 + $0xe8] sm:$0xff]
  %v486 = vld [vmem:[%s2 + $0xf0] sm:$0xff]
  %v487 = vld [vmem:[%s2 + $0xf8] sm:$0xff]
  %v488 = vld [vmem:[%s2 + $0x100] sm:$0xff]
  %v489 = vld [vmem:[%s2 + $0x108] sm:$0xff]
  %v490 = vld [vmem:[%s2 + $0x110] sm:$0xff]
  %v491 = vld [vmem:[%s2 + $0x118] sm:$0xff]
  %v492 = vld [vmem:[%s2 + $0x120] sm:$0xff]
  %v493 = vld [vmem:[%s2 + $0x128] sm:$0xff]
  %v494 = vld [vmem:[%s2 + $0x130] sm:$0xff]
  %v495 = vld [vmem:[%s2 + $0x138] sm:$0xff]
  %v496 = vld [vmem:[%s2 + $0x140] sm:$0xff]
  %v497 = vld [vmem:[%s2 + $0x148] sm:$0xff]
  %v498 = vld [vmem:[%s2 + $0x150] sm:$0xff]
  %v499 = vld [vmem:[%s2 + $0x158] sm:$0xff]
  %v500 = vld [vmem:[%s2 + $0x160] sm:$0xff]
  %v501 = vld [vmem:[%s2 + $0x168] sm:$0xff]
  %v502 = vld [vmem:[%s2 + $0x170] sm:$0xff]
  %v503 = vld [vmem:[%s2 + $0x178] sm:$0xff]
  %v504 = vld [vmem:[%s2 + $0x180] sm:$0xff]
  %v505 = vld [vmem:[%s2 + $0x188] sm:$0xff]
  %v506 = vld [vmem:[%s2 + $0x190] sm:$0xff]
  %v507 = vld [vmem:[%s2 + $0x198] sm:$0xff]
  %v508 = vld [vmem:[%s2 + $0x1a0] sm:$0xff]
  %v509 = vld [vmem:[%s2 + $0x1a8] sm:$0xff]
  %v510 = vld [vmem:[%s2 + $0x1b0] sm:$0xff]
  %v511 = vld [vmem:[%s2 + $0x1b8] sm:$0xff]
  %v512 = vld [vmem:[%s2 + $0x1c0] sm:$0xff]
  %v513 = vld [vmem:[%s2 + $0x1c8] sm:$0xff]
  %v514 = vld [vmem:[%s2 + $0x1d0] sm:$0xff]
  %v515 = vld [vmem:[%s2 + $0x1d8] sm:$0xff]
  %v516 = vld [vmem:[%s2 + $0x1e0] sm:$0xff]
  %v517 = vld [vmem:[%s2 + $0x1e8] sm:$0xff]
  %v518 = vld [vmem:[%s2 + $0x1f0] sm:$0xff]
  %v519 = vld [vmem:[%s2 + $0x1f8] sm:$0xff]
  %v520 = vld [vmem:[%s2 + $0x200] sm:$0xff]
  %v521 = vld [vmem:[%s2 + $0x208] sm:$0xff]
  %v522 = vld [vmem:[%s2 + $0x210] sm:$0xff]
  %v523 = vld [vmem:[%s2 + $0x218] sm:$0xff]
  %v524 = vld [vmem:[%s2 + $0x220] sm:$0xff]
  %v525 = vld [vmem:[%s2 + $0x228] sm:$0xff]
  %v526 = vld [vmem:[%s2 + $0x230] sm:$0xff]
  %v527 = vld [vmem:[%s2 + $0x238] sm:$0xff]
  %v528 = vld [vmem:[%s2 + $0x240] sm:$0xff]
  %v529 = vld [vmem:[%s2 + $0x248] sm:$0xff]
  %v530 = vld [vmem:[%s2 + $0x250] sm:$0xff]
  %v531 = vld [vmem:[%s2 + $0x258] sm:$0xff]
  %v532 = vld [vmem:[%s2 + $0x260] sm:$0xff]
  %v533 = vld [vmem:[%s2 + $0x268] sm:$0xff]
  %v534 = vld [vmem:[%s2 + $0x270] sm:$0xff]
  %v535 = vld [vmem:[%s2 + $0x278] sm:$0xff]
  %v536 = vld [vmem:[%s2 + $0x280] sm:$0xff]
  %v537 = vld [vmem:[%s2 + $0x288] sm:$0xff]
  %v538 = vld [vmem:[%s2 + $0x290] sm:$0xff]
  %v539 = vld [vmem:[%s2 + $0x298] sm:$0xff]
  %v540 = vld [vmem:[%s2 + $0x2a0] sm:$0xff]
  %v541 = vld [vmem:[%s2 + $0x2a8] sm:$0xff]
  %v542 = vld [vmem:[%s2 + $0x2b0] sm:$0xff]
  %v543 = vld [vmem:[%s2 + $0x2b8] sm:$0xff]
  %v544 = vld [vmem:[%s2 + $0x2c0] sm:$0xff]
  %v545 = vld [vmem:[%s2 + $0x2c8] sm:$0xff]
  %v546 = vld [vmem:[%s2 + $0x2d0] sm:$0xff]
  %v547 = vld [vmem:[%s2 + $0x2d8] sm:$0xff]
  %v548 = vld [vmem:[%s2 + $0x2e0] sm:$0xff]
  %v549 = vld [vmem:[%s2 + $0x2e8] sm:$0xff]
  %v550 = vld [vmem:[%s2 + $0x2f0] sm:$0xff]
  %v551 = vld [vmem:[%s2 + $0x2f8] sm:$0xff]
  %s552 = scalar_lea.vmem %s5, 1
  %v553 = vld [vmem:[%s552] ss:$8 sm:$0xf]
  %v555 = vlaneseq
  %v556 = vshrl.u32 %v555, 7
  %v557 = vsub.s32 0, %v556
  %v558 = vrot.slane %v553, %v557
  %v559 = vlaneseq
  %v560 = vshrl.u32 %v559, 7
  %v561 = vsub.s32 1, %v560
  %v562 = vrot.slane %v553, %v561
  %v563 = vlaneseq
  %v564 = vshrl.u32 %v563, 7
  %v565 = vsub.s32 2, %v564
  %v566 = vrot.slane %v553, %v565
  %v567 = vlaneseq
  %v568 = vshrl.u32 %v567, 7
  %v569 = vsub.s32 3, %v568
  %v570 = vrot.slane %v553, %v569
  %v671 = vunpack.c.l.b16 %v456
  %v672 = vunpack.c.h.b16 %v456
  %v673 = vunpack.c.l.b16 %v457
  %v674 = vunpack.c.h.b16 %v457
  %v675 = vunpack.c.l.b16 %v458
  %v676 = vunpack.c.h.b16 %v458
  %v677 = vunpack.c.l.b16 %v459
  %v678 = vunpack.c.h.b16 %v459
  %v679 = vunpack.c.l.b16 %v460
  %v680 = vunpack.c.h.b16 %v460
  %v681 = vunpack.c.l.b16 %v461
  %v682 = vunpack.c.h.b16 %v461
  %v683 = vunpack.c.l.b16 %v462
  %v684 = vunpack.c.h.b16 %v462
  %v685 = vunpack.c.l.b16 %v463
  %v686 = vunpack.c.h.b16 %v463
  %v687 = vunpack.c.l.b16 %v464
  %v688 = vunpack.c.h.b16 %v464
  %v689 = vunpack.c.l.b16 %v465
  %v690 = vunpack.c.h.b16 %v465
  %v691 = vunpack.c.l.b16 %v466
  %v692 = vunpack.c.h.b16 %v466
  %v693 = vunpack.c.l.b16 %v467
  %v694 = vunpack.c.h.b16 %v467
  %v695 = vunpack.c.l.b16 %v468
  %v696 = vunpack.c.h.b16 %v468
  %v697 = vunpack.c.l.b16 %v469
  %v698 = vunpack.c.h.b16 %v469
  %v699 = vunpack.c.l.b16 %v470
  %v700 = vunpack.c.h.b16 %v470
  %v701 = vunpack.c.l.b16 %v471
  %v702 = vunpack.c.h.b16 %v471
  %v703 = vunpack.c.l.b16 %v472
  %v704 = vunpack.c.h.b16 %v472
  %v705 = vunpack.c.l.b16 %v473
  %v706 = vunpack.c.h.b16 %v473
  %v707 = vunpack.c.l.b16 %v474
  %v708 = vunpack.c.h.b16 %v474
  %v709 = vunpack.c.l.b16 %v475
  %v710 = vunpack.c.h.b16 %v475
  %v711 = vunpack.c.l.b16 %v476
  %v712 = vunpack.c.h.b16 %v476
  %v713 = vunpack.c.l.b16 %v477
  %v714 = vunpack.c.h.b16 %v477
  %v715 = vunpack.c.l.b16 %v478
  %v716 = vunpack.c.h.b16 %v478
  %v717 = vunpack.c.l.b16 %v479
  %v718 = vunpack.c.h.b16 %v479
  %v719 = vunpack.c.l.b16 %v480
  %v720 = vunpack.c.h.b16 %v480
  %v721 = vunpack.c.l.b16 %v481
  %v722 = vunpack.c.h.b16 %v481
  %v723 = vunpack.c.l.b16 %v482
  %v724 = vunpack.c.h.b16 %v482
  %v725 = vunpack.c.l.b16 %v483
  %v726 = vunpack.c.h.b16 %v483
  %v727 = vunpack.c.l.b16 %v484
  %v728 = vunpack.c.h.b16 %v484
  %v729 = vunpack.c.l.b16 %v485
  %v730 = vunpack.c.h.b16 %v485
  %v731 = vunpack.c.l.b16 %v486
  %v732 = vunpack.c.h.b16 %v486
  %v733 = vunpack.c.l.b16 %v487
  %v734 = vunpack.c.h.b16 %v487
  %v735 = vunpack.c.l.b16 %v488
  %v736 = vunpack.c.h.b16 %v488
  %v737 = vunpack.c.l.b16 %v489
  %v738 = vunpack.c.h.b16 %v489
  %v739 = vunpack.c.l.b16 %v490
  %v740 = vunpack.c.h.b16 %v490
  %v741 = vunpack.c.l.b16 %v491
  %v742 = vunpack.c.h.b16 %v491
  %v743 = vunpack.c.l.b16 %v492
  %v744 = vunpack.c.h.b16 %v492
  %v745 = vunpack.c.l.b16 %v493
  %v746 = vunpack.c.h.b16 %v493
  %v747 = vunpack.c.l.b16 %v494
  %v748 = vunpack.c.h.b16 %v494
  %v749 = vunpack.c.l.b16 %v495
  %v750 = vunpack.c.h.b16 %v495
  %v751 = vunpack.c.l.b16 %v496
  %v752 = vunpack.c.h.b16 %v496
  %v753 = vunpack.c.l.b16 %v497
  %v754 = vunpack.c.h.b16 %v497
  %v755 = vunpack.c.l.b16 %v498
  %v756 = vunpack.c.h.b16 %v498
  %v757 = vunpack.c.l.b16 %v499
  %v758 = vunpack.c.h.b16 %v499
  %v759 = vunpack.c.l.b16 %v500
  %v760 = vunpack.c.h.b16 %v500
  %v761 = vunpack.c.l.b16 %v501
  %v762 = vunpack.c.h.b16 %v501
  %v763 = vunpack.c.l.b16 %v502
  %v764 = vunpack.c.h.b16 %v502
  %v765 = vunpack.c.l.b16 %v503
  %v766 = vunpack.c.h.b16 %v503
  %v767 = vunpack.c.l.b16 %v504
  %v768 = vunpack.c.h.b16 %v504
  %v769 = vunpack.c.l.b16 %v505
  %v770 = vunpack.c.h.b16 %v505
  %v771 = vunpack.c.l.b16 %v506
  %v772 = vunpack.c.h.b16 %v506
  %v773 = vunpack.c.l.b16 %v507
  %v774 = vunpack.c.h.b16 %v507
  %v775 = vunpack.c.l.b16 %v508
  %v776 = vunpack.c.h.b16 %v508
  %v777 = vunpack.c.l.b16 %v509
  %v778 = vunpack.c.h.b16 %v509
  %v779 = vunpack.c.l.b16 %v510
  %v780 = vunpack.c.h.b16 %v510
  %v781 = vunpack.c.l.b16 %v511
  %v782 = vunpack.c.h.b16 %v511
  %v783 = vunpack.c.l.b16 %v512
  %v784 = vunpack.c.h.b16 %v512
  %v785 = vunpack.c.l.b16 %v513
  %v786 = vunpack.c.h.b16 %v513
  %v787 = vunpack.c.l.b16 %v514
  %v788 = vunpack.c.h.b16 %v514
  %v789 = vunpack.c.l.b16 %v515
  %v790 = vunpack.c.h.b16 %v515
  %v791 = vunpack.c.l.b16 %v516
  %v792 = vunpack.c.h.b16 %v516
  %v793 = vunpack.c.l.b16 %v517
  %v794 = vunpack.c.h.b16 %v517
  %v795 = vunpack.c.l.b16 %v518
  %v796 = vunpack.c.h.b16 %v518
  %v797 = vunpack.c.l.b16 %v519
  %v798 = vunpack.c.h.b16 %v519
  %v799 = vunpack.c.l.b16 %v520
  %v800 = vunpack.c.h.b16 %v520
  %v801 = vunpack.c.l.b16 %v521
  %v802 = vunpack.c.h.b16 %v521
  %v803 = vunpack.c.l.b16 %v522
  %v804 = vunpack.c.h.b16 %v522
  %v805 = vunpack.c.l.b16 %v523
  %v806 = vunpack.c.h.b16 %v523
  %v807 = vunpack.c.l.b16 %v524
  %v808 = vunpack.c.h.b16 %v524
  %v809 = vunpack.c.l.b16 %v525
  %v810 = vunpack.c.h.b16 %v525
  %v811 = vunpack.c.l.b16 %v526
  %v812 = vunpack.c.h.b16 %v526
  %v813 = vunpack.c.l.b16 %v527
  %v814 = vunpack.c.h.b16 %v527
  %v815 = vunpack.c.l.b16 %v528
  %v816 = vunpack.c.h.b16 %v528
  %v817 = vunpack.c.l.b16 %v529
  %v818 = vunpack.c.h.b16 %v529
  %v819 = vunpack.c.l.b16 %v530
  %v820 = vunpack.c.h.b16 %v530
  %v821 = vunpack.c.l.b16 %v531
  %v822 = vunpack.c.h.b16 %v531
  %v823 = vunpack.c.l.b16 %v532
  %v824 = vunpack.c.h.b16 %v532
  %v825 = vunpack.c.l.b16 %v533
  %v826 = vunpack.c.h.b16 %v533
  %v827 = vunpack.c.l.b16 %v534
  %v828 = vunpack.c.h.b16 %v534
  %v829 = vunpack.c.l.b16 %v535
  %v830 = vunpack.c.h.b16 %v535
  %v831 = vunpack.c.l.b16 %v536
  %v832 = vunpack.c.h.b16 %v536
  %v833 = vunpack.c.l.b16 %v537
  %v834 = vunpack.c.h.b16 %v537
  %v835 = vunpack.c.l.b16 %v538
  %v836 = vunpack.c.h.b16 %v538
  %v837 = vunpack.c.l.b16 %v539
  %v838 = vunpack.c.h.b16 %v539
  %v839 = vunpack.c.l.b16 %v540
  %v840 = vunpack.c.h.b16 %v540
  %v841 = vunpack.c.l.b16 %v541
  %v842 = vunpack.c.h.b16 %v541
  %v843 = vunpack.c.l.b16 %v542
  %v844 = vunpack.c.h.b16 %v542
  %v845 = vunpack.c.l.b16 %v543
  %v846 = vunpack.c.h.b16 %v543
  %v847 = vunpack.c.l.b16 %v544
  %v848 = vunpack.c.h.b16 %v544
  %v849 = vunpack.c.l.b16 %v545
  %v850 = vunpack.c.h.b16 %v545
  %v851 = vunpack.c.l.b16 %v546
  %v852 = vunpack.c.h.b16 %v546
  %v853 = vunpack.c.l.b16 %v547
  %v854 = vunpack.c.h.b16 %v547
  %v855 = vunpack.c.l.b16 %v548
  %v856 = vunpack.c.h.b16 %v548
  %v857 = vunpack.c.l.b16 %v549
  %v858 = vunpack.c.h.b16 %v549
  %v859 = vunpack.c.l.b16 %v550
  %v860 = vunpack.c.h.b16 %v550
  %v861 = vunpack.c.l.b16 %v551
  %v862 = vunpack.c.h.b16 %v551
  %v863 = vpack.c.b16 %v675, %v671
  %v864 = vpack.c.b16 %v676, %v672
  %v865 = vpack.c.b16 %v677, %v673
  %v866 = vpack.c.b16 %v678, %v674
  %v867 = vpack.c.b16 %v683, %v679
  %v868 = vpack.c.b16 %v684, %v680
  %v869 = vpack.c.b16 %v685, %v681
  %v870 = vpack.c.b16 %v686, %v682
  %v871 = vpack.c.b16 %v691, %v687
  %v872 = vpack.c.b16 %v692, %v688
  %v873 = vpack.c.b16 %v693, %v689
  %v874 = vpack.c.b16 %v694, %v690
  %v875 = vpack.c.b16 %v699, %v695
  %v876 = vpack.c.b16 %v700, %v696
  %v877 = vpack.c.b16 %v701, %v697
  %v878 = vpack.c.b16 %v702, %v698
  %v879 = vpack.c.b16 %v707, %v703
  %v880 = vpack.c.b16 %v708, %v704
  %v881 = vpack.c.b16 %v709, %v705
  %v882 = vpack.c.b16 %v710, %v706
  %v883 = vpack.c.b16 %v715, %v711
  %v884 = vpack.c.b16 %v716, %v712
  %v885 = vpack.c.b16 %v717, %v713
  %v886 = vpack.c.b16 %v718, %v714
  %v887 = vpack.c.b16 %v723, %v719
  %v888 = vpack.c.b16 %v724, %v720
  %v889 = vpack.c.b16 %v725, %v721
  %v890 = vpack.c.b16 %v726, %v722
  %v891 = vpack.c.b16 %v731, %v727
  %v892 = vpack.c.b16 %v732, %v728
  %v893 = vpack.c.b16 %v733, %v729
  %v894 = vpack.c.b16 %v734, %v730
  %v895 = vpack.c.b16 %v739, %v735
  %v896 = vpack.c.b16 %v740, %v736
  %v897 = vpack.c.b16 %v741, %v737
  %v898 = vpack.c.b16 %v742, %v738
  %v899 = vpack.c.b16 %v747, %v743
  %v900 = vpack.c.b16 %v748, %v744
  %v901 = vpack.c.b16 %v749, %v745
  %v902 = vpack.c.b16 %v750, %v746
  %v903 = vpack.c.b16 %v755, %v751
  %v904 = vpack.c.b16 %v756, %v752
  %v905 = vpack.c.b16 %v757, %v753
  %v906 = vpack.c.b16 %v758, %v754
  %v907 = vpack.c.b16 %v763, %v759
  %v908 = vpack.c.b16 %v764, %v760
  %v909 = vpack.c.b16 %v765, %v761
  %v910 = vpack.c.b16 %v766, %v762
  %v911 = vpack.c.b16 %v771, %v767
  %v912 = vpack.c.b16 %v772, %v768
  %v913 = vpack.c.b16 %v773, %v769
  %v914 = vpack.c.b16 %v774, %v770
  %v915 = vpack.c.b16 %v779, %v775
  %v916 = vpack.c.b16 %v780, %v776
  %v917 = vpack.c.b16 %v781, %v777
  %v918 = vpack.c.b16 %v782, %v778
  %v919 = vpack.c.b16 %v787, %v783
  %v920 = vpack.c.b16 %v788, %v784
  %v921 = vpack.c.b16 %v789, %v785
  %v922 = vpack.c.b16 %v790, %v786
  %v923 = vpack.c.b16 %v795, %v791
  %v924 = vpack.c.b16 %v796, %v792
  %v925 = vpack.c.b16 %v797, %v793
  %v926 = vpack.c.b16 %v798, %v794
  %v927 = vpack.c.b16 %v803, %v799
  %v928 = vpack.c.b16 %v804, %v800
  %v929 = vpack.c.b16 %v805, %v801
  %v930 = vpack.c.b16 %v806, %v802
  %v931 = vpack.c.b16 %v811, %v807
  %v932 = vpack.c.b16 %v812, %v808
  %v933 = vpack.c.b16 %v813, %v809
  %v934 = vpack.c.b16 %v814, %v810
  %v935 = vpack.c.b16 %v819, %v815
  %v936 = vpack.c.b16 %v820, %v816
  %v937 = vpack.c.b16 %v821, %v817
  %v938 = vpack.c.b16 %v822, %v818
  %v939 = vpack.c.b16 %v827, %v823
  %v940 = vpack.c.b16 %v828, %v824
  %v941 = vpack.c.b16 %v829, %v825
  %v942 = vpack.c.b16 %v830, %v826
  %v943 = vpack.c.b16 %v835, %v831
  %v944 = vpack.c.b16 %v836, %v832
  %v945 = vpack.c.b16 %v837, %v833
  %v946 = vpack.c.b16 %v838, %v834
  %v947 = vpack.c.b16 %v843, %v839
  %v948 = vpack.c.b16 %v844, %v840
  %v949 = vpack.c.b16 %v845, %v841
  %v950 = vpack.c.b16 %v846, %v842
  %v951 = vpack.c.b16 %v851, %v847
  %v952 = vpack.c.b16 %v852, %v848
  %v953 = vpack.c.b16 %v853, %v849
  %v954 = vpack.c.b16 %v854, %v850
  %v955 = vpack.c.b16 %v859, %v855
  %v956 = vpack.c.b16 %v860, %v856
  %v957 = vpack.c.b16 %v861, %v857
  %v958 = vpack.c.b16 %v862, %v858
  %1055 = vmatprep.subr.bf16.mxu0 %v864
  %1056 = vmatpush1.bf16.msra.mxu0 %v863
  %1057 = vmatprep.subr.bf16.mxu0 %v868
  %1058 = vmatpush1.bf16.msra.mxu0 %v867
  %1059 = vmatprep.subr.bf16.mxu0 %v872
  %1060 = vmatpush1.bf16.msra.mxu0 %v871
  %1061 = vmatprep.subr.bf16.mxu0 %v876
  %1062 = vmatpush1.bf16.msra.mxu0 %v875
  %1063 = vmatprep.subr.bf16.mxu0 %v880
  %1064 = vmatpush1.bf16.msra.mxu0 %v879
  %1065 = vmatprep.subr.bf16.mxu0 %v884
  %1066 = vmatpush1.bf16.msra.mxu0 %v883
  %1067 = vmatprep.subr.bf16.mxu0 %v888
  %1068 = vmatpush1.bf16.msra.mxu0 %v887
  %1069 = vmatprep.subr.bf16.mxu0 %v892
  %1070 = vmatpush1.bf16.msra.mxu0 %v891
  %1071 = vmatprep.subr.bf16.mxu0 %v896
  %1072 = vmatpush1.bf16.msra.mxu0 %v895
  %1073 = vmatprep.subr.bf16.mxu0 %v900
  %1074 = vmatpush1.bf16.msra.mxu0 %v899
  %1075 = vmatprep.subr.bf16.mxu0 %v904
  %1076 = vmatpush1.bf16.msra.mxu0 %v903
  %1077 = vmatprep.subr.bf16.mxu0 %v908
  %1078 = vmatpush1.bf16.msra.mxu0 %v907
  %1079 = vmatprep.subr.bf16.mxu0 %v912
  %1080 = vmatpush1.bf16.msra.mxu0 %v911
  %1081 = vmatprep.subr.bf16.mxu0 %v916
  %1082 = vmatpush1.bf16.msra.mxu0 %v915
  %1083 = vmatprep.subr.bf16.mxu0 %v920
  %1084 = vmatpush1.bf16.msra.mxu0 %v919
  %1085 = vmatprep.subr.bf16.mxu0 %v924
  %1086 = vmatpush1.bf16.msra.mxu0 %v923
  %1087 = vmatprep.mubr.bf16.mxu0 %v454
  %1088 = vmatmul.mubr.bf16.gmra.mrb[0].mxu0 %v453
  %v1089 = vpop.f32.mrb[0].mxu0
  %v1090 = vadd.f32 %v558, %v1089
  %v1091 = vpop.f32.mrb[0].mxu0
  %v1092 = vadd.f32 %v562, %v1091
  %v1093 = vpop.f32.mrb[0].mxu0
  %v1094 = vpop.f32.mrb[0].mxu0
  %1095 = vdwg.mxu0
  %1096 = vmatprep.subr.bf16.mxu0 %v928
  %1097 = vmatpush1.bf16.msra.mxu0 %v927
  %1098 = vmatprep.subr.bf16.mxu0 %v932
  %1099 = vmatpush1.bf16.msra.mxu0 %v931
  %1100 = vmatprep.subr.bf16.mxu0 %v936
  %1101 = vmatpush1.bf16.msra.mxu0 %v935
  %1102 = vmatprep.subr.bf16.mxu0 %v940
  %1103 = vmatpush1.bf16.msra.mxu0 %v939
  %1104 = vmatprep.subr.bf16.mxu0 %v944
  %1105 = vmatpush1.bf16.msra.mxu0 %v943
  %1106 = vmatprep.subr.bf16.mxu0 %v948
  %1107 = vmatpush1.bf16.msra.mxu0 %v947
  %1108 = vmatprep.subr.bf16.mxu0 %v952
  %1109 = vmatpush1.bf16.msra.mxu0 %v951
  %1110 = vmatprep.subr.bf16.mxu0 %v956
  %1111 = vmatpush1.bf16.msra.mxu0 %v955
  %1112 = vmatprep.subr.bf16.mxu0 0
  %1113 = vmatpush1.bf16.msra.mxu0 0
  %1114 = vmatprep.subr.bf16.mxu0 0
  %1115 = vmatpush1.bf16.msra.mxu0 0
  %1116 = vmatprep.subr.bf16.mxu0 0
  %1117 = vmatpush1.bf16.msra.mxu0 0
  %1118 = vmatprep.subr.bf16.mxu0 0
  %1119 = vmatpush1.bf16.msra.mxu0 0
  %1120 = vmatprep.subr.bf16.mxu0 0
  %1121 = vmatpush1.bf16.msra.mxu0 0
  %1122 = vmatprep.subr.bf16.mxu0 0
  %1123 = vmatpush1.bf16.msra.mxu0 0
  %1124 = vmatprep.subr.bf16.mxu0 0
  %1125 = vmatpush1.bf16.msra.mxu0 0
  %1126 = vmatprep.subr.bf16.mxu0 0
  %1127 = vmatpush1.bf16.msra.mxu0 0
  %1128 = vmatprep.mubr.bf16.mxu0 0
  %1129 = vmatmul.mubr.bf16.gmra.mrb[0].mxu0 %v455
  %v1130 = vpop.f32.mrb[0].mxu0
  %v1131 = vadd.f32 %v1090, %v1130
  %v1132 = vpop.f32.mrb[0].mxu0
  %v1133 = vadd.f32 %v1092, %v1132
  %v1134 = vpop.f32.mrb[0].mxu0
  %v1135 = vpop.f32.mrb[0].mxu0
  %1136 = vdwg.mxu0
  %1137 = vmatprep.subr.bf16.mxu0 %v866
  %1138 = vmatpush1.bf16.msra.mxu0 %v865
  %1139 = vmatprep.subr.bf16.mxu0 %v870
  %1140 = vmatpush1.bf16.msra.mxu0 %v869
  %1141 = vmatprep.subr.bf16.mxu0 %v874
  %1142 = vmatpush1.bf16.msra.mxu0 %v873
  %1143 = vmatprep.subr.bf16.mxu0 %v878
  %1144 = vmatpush1.bf16.msra.mxu0 %v877
  %1145 = vmatprep.subr.bf16.mxu0 %v882
  %1146 = vmatpush1.bf16.msra.mxu0 %v881
  %1147 = vmatprep.subr.bf16.mxu0 %v886
  %1148 = vmatpush1.bf16.msra.mxu0 %v885
  %1149 = vmatprep.subr.bf16.mxu0 %v890
  %1150 = vmatpush1.bf16.msra.mxu0 %v889
  %1151 = vmatprep.subr.bf16.mxu0 %v894
  %1152 = vmatpush1.bf16.msra.mxu0 %v893
  %1153 = vmatprep.subr.bf16.mxu0 %v898
  %1154 = vmatpush1.bf16.msra.mxu0 %v897
  %1155 = vmatprep.subr.bf16.mxu0 %v902
  %1156 = vmatpush1.bf16.msra.mxu0 %v901
  %1157 = vmatprep.subr.bf16.mxu0 %v906
  %1158 = vmatpush1.bf16.msra.mxu0 %v905
  %1159 = vmatprep.subr.bf16.mxu0 %v910
  %1160 = vmatpush1.bf16.msra.mxu0 %v909
  %1161 = vmatprep.subr.bf16.mxu0 %v914
  %1162 = vmatpush1.bf16.msra.mxu0 %v913
  %1163 = vmatprep.subr.bf16.mxu0 %v918
  %1164 = vmatpush1.bf16.msra.mxu0 %v917
  %1165 = vmatprep.subr.bf16.mxu0 %v922
  %1166 = vmatpush1.bf16.msra.mxu0 %v921
  %1167 = vmatprep.subr.bf16.mxu0 %v926
  %1168 = vmatpush1.bf16.msra.mxu0 %v925
  %1169 = vmatprep.mubr.bf16.mxu0 %v454
  %1170 = vmatmul.mubr.bf16.gmra.mrb[0].mxu0 %v453
  %v1171 = vpop.f32.mrb[0].mxu0
  %v1172 = vadd.f32 %v566, %v1171
  %v1173 = vpop.f32.mrb[0].mxu0
  %v1174 = vadd.f32 %v570, %v1173
  %v1175 = vpop.f32.mrb[0].mxu0
  %v1176 = vpop.f32.mrb[0].mxu0
  %1177 = vdwg.mxu0
  %1178 = vmatprep.subr.bf16.mxu0 %v930
  %1179 = vmatpush1.bf16.msra.mxu0 %v929
  %1180 = vmatprep.subr.bf16.mxu0 %v934
  %1181 = vmatpush1.bf16.msra.mxu0 %v933
  %1182 = vmatprep.subr.bf16.mxu0 %v938
  %1183 = vmatpush1.bf16.msra.mxu0 %v937
  %1184 = vmatprep.subr.bf16.mxu0 %v942
  %1185 = vmatpush1.bf16.msra.mxu0 %v941
  %1186 = vmatprep.subr.bf16.mxu0 %v946
  %1187 = vmatpush1.bf16.msra.mxu0 %v945
  %1188 = vmatprep.subr.bf16.mxu0 %v950
  %1189 = vmatpush1.bf16.msra.mxu0 %v949
  %1190 = vmatprep.subr.bf16.mxu0 %v954
  %1191 = vmatpush1.bf16.msra.mxu0 %v953
  %1192 = vmatprep.subr.bf16.mxu0 %v958
  %1193 = vmatpush1.bf16.msra.mxu0 %v957
  %1194 = vmatprep.subr.bf16.mxu0 0
  %1195 = vmatpush1.bf16.msra.mxu0 0
  %1196 = vmatprep.subr.bf16.mxu0 0
  %1197 = vmatpush1.bf16.msra.mxu0 0
  %1198 = vmatprep.subr.bf16.mxu0 0
  %1199 = vmatpush1.bf16.msra.mxu0 0
  %1200 = vmatprep.subr.bf16.mxu0 0
  %1201 = vmatpush1.bf16.msra.mxu0 0
  %1202 = vmatprep.subr.bf16.mxu0 0
  %1203 = vmatpush1.bf16.msra.mxu0 0
  %1204 = vmatprep.subr.bf16.mxu0 0
  %1205 = vmatpush1.bf16.msra.mxu0 0
  %1206 = vmatprep.subr.bf16.mxu0 0
  %1207 = vmatpush1.bf16.msra.mxu0 0
  %1208 = vmatprep.subr.bf16.mxu0 0
  %1209 = vmatpush1.bf16.msra.mxu0 0
  %1210 = vmatprep.mubr.bf16.mxu0 0
  %1211 = vmatmul.mubr.bf16.gmra.mrb[0].mxu0 %v455
  %v1212 = vpop.f32.mrb[0].mxu0
  %v1213 = vadd.f32 %v1172, %v1212
  %v1214 = vpop.f32.mrb[0].mxu0
  %v1215 = vadd.f32 %v1174, %v1214
  %v1216 = vpop.f32.mrb[0].mxu0
  %v1217 = vpop.f32.mrb[0].mxu0
  %1218 = vdwg.mxu0
  %v1219 = vmax.f32 %v1131, 0.0
  %v1220 = vmax.f32 %v1133, 0.0
  %v1221 = vmax.f32 %v1213, 0.0
  %v1222 = vmax.f32 %v1215, 0.0
  %v1223 = vpack.c.bf16 %v1219, %v1219
  %v1224 = vpack.c.bf16 %v1220, %v1220
  %v1225 = vpack.c.bf16 %v1221, %v1221
  %v1226 = vpack.c.bf16 %v1222, %v1222
  %v1227 = vld [vmem:[%s3] sm:$0xf]
  %v1228 = vld [vmem:[%s3 + $0x4] sm:$0xf]
  %v1229 = vld [vmem:[%s3 + $0x8] sm:$0xf]
  %v1230 = vld [vmem:[%s3 + $0xc] sm:$0xf]
  %v1231 = vld [vmem:[%s3 + $0x10] sm:$0xf]
  %v1232 = vld [vmem:[%s3 + $0x14] sm:$0xf]
  %v1233 = vld [vmem:[%s3 + $0x18] sm:$0xf]
  %v1234 = vld [vmem:[%s3 + $0x1c] sm:$0xf]
  %v1235 = vld [vmem:[%s3 + $0x20] sm:$0xf]
  %v1236 = vld [vmem:[%s3 + $0x24] sm:$0xf]
  %v1237 = vld [vmem:[%s3 + $0x28] sm:$0xf]
  %v1238 = vld [vmem:[%s3 + $0x2c] sm:$0xf]
  %v1239 = vld [vmem:[%s3 + $0x30] sm:$0xf]
  %v1240 = vld [vmem:[%s3 + $0x34] sm:$0xf]
  %v1241 = vld [vmem:[%s3 + $0x38] sm:$0xf]
  %v1242 = vld [vmem:[%s3 + $0x3c] sm:$0xf]
  %v1243 = vld [vmem:[%s3 + $0x40] sm:$0xf]
  %v1244 = vld [vmem:[%s3 + $0x44] sm:$0xf]
  %v1245 = vld [vmem:[%s3 + $0x48] sm:$0xf]
  %v1246 = vld [vmem:[%s3 + $0x4c] sm:$0xf]
  %v1247 = vld [vmem:[%s3 + $0x50] sm:$0xf]
  %v1248 = vld [vmem:[%s3 + $0x54] sm:$0xf]
  %v1249 = vld [vmem:[%s3 + $0x58] sm:$0xf]
  %v1250 = vld [vmem:[%s3 + $0x5c] sm:$0xf]
  %v1251 = vld [vmem:[%s3 + $0x60] sm:$0xf]
  %v1252 = vld [vmem:[%s3 + $0x64] sm:$0xf]
  %v1253 = vld [vmem:[%s3 + $0x68] sm:$0xf]
  %v1254 = vld [vmem:[%s3 + $0x6c] sm:$0xf]
  %v1255 = vld [vmem:[%s3 + $0x70] sm:$0xf]
  %v1256 = vld [vmem:[%s3 + $0x74] sm:$0xf]
  %v1257 = vld [vmem:[%s3 + $0x78] sm:$0xf]
  %v1258 = vld [vmem:[%s3 + $0x7c] sm:$0xf]
  %v1259 = vld [vmem:[%s3 + $0x80] sm:$0xf]
  %v1260 = vld [vmem:[%s3 + $0x84] sm:$0xf]
  %v1261 = vld [vmem:[%s3 + $0x88] sm:$0xf]
  %v1262 = vld [vmem:[%s3 + $0x8c] sm:$0xf]
  %v1263 = vld [vmem:[%s3 + $0x90] sm:$0xf]
  %v1264 = vld [vmem:[%s3 + $0x94] sm:$0xf]
  %v1265 = vld [vmem:[%s3 + $0x98] sm:$0xf]
  %v1266 = vld [vmem:[%s3 + $0x9c] sm:$0xf]
  %v1267 = vld [vmem:[%s3 + $0xa0] sm:$0xf]
  %v1268 = vld [vmem:[%s3 + $0xa4] sm:$0xf]
  %v1269 = vld [vmem:[%s3 + $0xa8] sm:$0xf]
  %v1270 = vld [vmem:[%s3 + $0xac] sm:$0xf]
  %v1271 = vld [vmem:[%s3 + $0xb0] sm:$0xf]
  %v1272 = vld [vmem:[%s3 + $0xb4] sm:$0xf]
  %v1273 = vld [vmem:[%s3 + $0xb8] sm:$0xf]
  %v1274 = vld [vmem:[%s3 + $0xbc] sm:$0xf]
  %v1275 = vld [vmem:[%s3 + $0xc0] sm:$0xf]
  %v1276 = vld [vmem:[%s3 + $0xc4] sm:$0xf]
  %v1277 = vld [vmem:[%s3 + $0xc8] sm:$0xf]
  %v1278 = vld [vmem:[%s3 + $0xcc] sm:$0xf]
  %v1279 = vld [vmem:[%s3 + $0xd0] sm:$0xf]
  %v1280 = vld [vmem:[%s3 + $0xd4] sm:$0xf]
  %v1281 = vld [vmem:[%s3 + $0xd8] sm:$0xf]
  %v1282 = vld [vmem:[%s3 + $0xdc] sm:$0xf]
  %v1283 = vld [vmem:[%s3 + $0xe0] sm:$0xf]
  %v1284 = vld [vmem:[%s3 + $0xe4] sm:$0xf]
  %v1285 = vld [vmem:[%s3 + $0xe8] sm:$0xf]
  %v1286 = vld [vmem:[%s3 + $0xec] sm:$0xf]
  %v1287 = vld [vmem:[%s3 + $0xf0] sm:$0xf]
  %v1288 = vld [vmem:[%s3 + $0xf4] sm:$0xf]
  %v1289 = vld [vmem:[%s3 + $0xf8] sm:$0xf]
  %v1290 = vld [vmem:[%s3 + $0xfc] sm:$0xf]
  %v1291 = vld [vmem:[%s5 + $0x2] ss:$0 sm:$0xff]
  %v1356 = vunpack.c.l.b16 %v1227
  %v1357 = vunpack.c.l.b16 %v1228
  %v1358 = vunpack.c.l.b16 %v1229
  %v1359 = vunpack.c.l.b16 %v1230
  %v1360 = vunpack.c.l.b16 %v1231
  %v1361 = vunpack.c.l.b16 %v1232
  %v1362 = vunpack.c.l.b16 %v1233
  %v1363 = vunpack.c.l.b16 %v1234
  %v1364 = vunpack.c.l.b16 %v1235
  %v1365 = vunpack.c.l.b16 %v1236
  %v1366 = vunpack.c.l.b16 %v1237
  %v1367 = vunpack.c.l.b16 %v1238
  %v1368 = vunpack.c.l.b16 %v1239
  %v1369 = vunpack.c.l.b16 %v1240
  %v1370 = vunpack.c.l.b16 %v1241
  %v1371 = vunpack.c.l.b16 %v1242
  %v1372 = vunpack.c.l.b16 %v1243
  %v1373 = vunpack.c.l.b16 %v1244
  %v1374 = vunpack.c.l.b16 %v1245
  %v1375 = vunpack.c.l.b16 %v1246
  %v1376 = vunpack.c.l.b16 %v1247
  %v1377 = vunpack.c.l.b16 %v1248
  %v1378 = vunpack.c.l.b16 %v1249
  %v1379 = vunpack.c.l.b16 %v1250
  %v1380 = vunpack.c.l.b16 %v1251
  %v1381 = vunpack.c.l.b16 %v1252
  %v1382 = vunpack.c.l.b16 %v1253
  %v1383 = vunpack.c.l.b16 %v1254
  %v1384 = vunpack.c.l.b16 %v1255
  %v1385 = vunpack.c.l.b16 %v1256
  %v1386 = vunpack.c.l.b16 %v1257
  %v1387 = vunpack.c.l.b16 %v1258
  %v1388 = vunpack.c.l.b16 %v1259
  %v1389 = vunpack.c.l.b16 %v1260
  %v1390 = vunpack.c.l.b16 %v1261
  %v1391 = vunpack.c.l.b16 %v1262
  %v1392 = vunpack.c.l.b16 %v1263
  %v1393 = vunpack.c.l.b16 %v1264
  %v1394 = vunpack.c.l.b16 %v1265
  %v1395 = vunpack.c.l.b16 %v1266
  %v1396 = vunpack.c.l.b16 %v1267
  %v1397 = vunpack.c.l.b16 %v1268
  %v1398 = vunpack.c.l.b16 %v1269
  %v1399 = vunpack.c.l.b16 %v1270
  %v1400 = vunpack.c.l.b16 %v1271
  %v1401 = vunpack.c.l.b16 %v1272
  %v1402 = vunpack.c.l.b16 %v1273
  %v1403 = vunpack.c.l.b16 %v1274
  %v1404 = vunpack.c.l.b16 %v1275
  %v1405 = vunpack.c.l.b16 %v1276
  %v1406 = vunpack.c.l.b16 %v1277
  %v1407 = vunpack.c.l.b16 %v1278
  %v1408 = vunpack.c.l.b16 %v1279
  %v1409 = vunpack.c.l.b16 %v1280
  %v1410 = vunpack.c.l.b16 %v1281
  %v1411 = vunpack.c.l.b16 %v1282
  %v1412 = vunpack.c.l.b16 %v1283
  %v1413 = vunpack.c.l.b16 %v1284
  %v1414 = vunpack.c.l.b16 %v1285
  %v1415 = vunpack.c.l.b16 %v1286
  %v1416 = vunpack.c.l.b16 %v1287
  %v1417 = vunpack.c.l.b16 %v1288
  %v1418 = vunpack.c.l.b16 %v1289
  %v1419 = vunpack.c.l.b16 %v1290
  %v1420 = vpack.c.b16 %v1357, %v1356
  %v1421 = vpack.c.b16 %v1359, %v1358
  %v1422 = vpack.c.b16 %v1361, %v1360
  %v1423 = vpack.c.b16 %v1363, %v1362
  %v1424 = vpack.c.b16 %v1365, %v1364
  %v1425 = vpack.c.b16 %v1367, %v1366
  %v1426 = vpack.c.b16 %v1369, %v1368
  %v1427 = vpack.c.b16 %v1371, %v1370
  %v1428 = vpack.c.b16 %v1373, %v1372
  %v1429 = vpack.c.b16 %v1375, %v1374
  %v1430 = vpack.c.b16 %v1377, %v1376
  %v1431 = vpack.c.b16 %v1379, %v1378
  %v1432 = vpack.c.b16 %v1381, %v1380
  %v1433 = vpack.c.b16 %v1383, %v1382
  %v1434 = vpack.c.b16 %v1385, %v1384
  %v1435 = vpack.c.b16 %v1387, %v1386
  %v1436 = vpack.c.b16 %v1389, %v1388
  %v1437 = vpack.c.b16 %v1391, %v1390
  %v1438 = vpack.c.b16 %v1393, %v1392
  %v1439 = vpack.c.b16 %v1395, %v1394
  %v1440 = vpack.c.b16 %v1397, %v1396
  %v1441 = vpack.c.b16 %v1399, %v1398
  %v1442 = vpack.c.b16 %v1401, %v1400
  %v1443 = vpack.c.b16 %v1403, %v1402
  %v1444 = vpack.c.b16 %v1405, %v1404
  %v1445 = vpack.c.b16 %v1407, %v1406
  %v1446 = vpack.c.b16 %v1409, %v1408
  %v1447 = vpack.c.b16 %v1411, %v1410
  %v1448 = vpack.c.b16 %v1413, %v1412
  %v1449 = vpack.c.b16 %v1415, %v1414
  %v1450 = vpack.c.b16 %v1417, %v1416
  %v1451 = vpack.c.b16 %v1419, %v1418
  %1484 = vmatprep.subr.bf16.mxu0 0
  %1485 = vmatpush1.bf16.msra.mxu0 %v1420
  %1486 = vmatprep.subr.bf16.mxu0 0
  %1487 = vmatpush1.bf16.msra.mxu0 %v1421
  %1488 = vmatprep.subr.bf16.mxu0 0
  %1489 = vmatpush1.bf16.msra.mxu0 %v1422
  %1490 = vmatprep.subr.bf16.mxu0 0
  %1491 = vmatpush1.bf16.msra.mxu0 %v1423
  %1492 = vmatprep.subr.bf16.mxu0 0
  %1493 = vmatpush1.bf16.msra.mxu0 %v1424
  %1494 = vmatprep.subr.bf16.mxu0 0
  %1495 = vmatpush1.bf16.msra.mxu0 %v1425
  %1496 = vmatprep.subr.bf16.mxu0 0
  %1497 = vmatpush1.bf16.msra.mxu0 %v1426
  %1498 = vmatprep.subr.bf16.mxu0 0
  %1499 = vmatpush1.bf16.msra.mxu0 %v1427
  %1500 = vmatprep.subr.bf16.mxu0 0
  %1501 = vmatpush1.bf16.msra.mxu0 %v1428
  %1502 = vmatprep.subr.bf16.mxu0 0
  %1503 = vmatpush1.bf16.msra.mxu0 %v1429
  %1504 = vmatprep.subr.bf16.mxu0 0
  %1505 = vmatpush1.bf16.msra.mxu0 %v1430
  %1506 = vmatprep.subr.bf16.mxu0 0
  %1507 = vmatpush1.bf16.msra.mxu0 %v1431
  %1508 = vmatprep.subr.bf16.mxu0 0
  %1509 = vmatpush1.bf16.msra.mxu0 %v1432
  %1510 = vmatprep.subr.bf16.mxu0 0
  %1511 = vmatpush1.bf16.msra.mxu0 %v1433
  %1512 = vmatprep.subr.bf16.mxu0 0
  %1513 = vmatpush1.bf16.msra.mxu0 %v1434
  %1514 = vmatprep.subr.bf16.mxu0 0
  %1515 = vmatpush1.bf16.msra.mxu0 %v1435
  %1516 = vmatprep.mubr.bf16.mxu0 %v1224
  %1517 = vmatmul.mubr.bf16.gmra.mrb[0].mxu0 %v1223
  %v1518 = vpop.f32.mrb[0].mxu0
  %v1519 = vadd.f32 %v1291, %v1518
  %v1520 = vpop.f32.mrb[0].mxu0
  %v1521 = vpop.f32.mrb[0].mxu0
  %v1522 = vpop.f32.mrb[0].mxu0
  %1523 = vdwg.mxu0
  %1524 = vmatprep.subr.bf16.mxu0 0
  %1525 = vmatpush1.bf16.msra.mxu0 %v1436
  %1526 = vmatprep.subr.bf16.mxu0 0
  %1527 = vmatpush1.bf16.msra.mxu0 %v1437
  %1528 = vmatprep.subr.bf16.mxu0 0
  %1529 = vmatpush1.bf16.msra.mxu0 %v1438
  %1530 = vmatprep.subr.bf16.mxu0 0
  %1531 = vmatpush1.bf16.msra.mxu0 %v1439
  %1532 = vmatprep.subr.bf16.mxu0 0
  %1533 = vmatpush1.bf16.msra.mxu0 %v1440
  %1534 = vmatprep.subr.bf16.mxu0 0
  %1535 = vmatpush1.bf16.msra.mxu0 %v1441
  %1536 = vmatprep.subr.bf16.mxu0 0
  %1537 = vmatpush1.bf16.msra.mxu0 %v1442
  %1538 = vmatprep.subr.bf16.mxu0 0
  %1539 = vmatpush1.bf16.msra.mxu0 %v1443
  %1540 = vmatprep.subr.bf16.mxu0 0
  %1541 = vmatpush1.bf16.msra.mxu0 %v1444
  %1542 = vmatprep.subr.bf16.mxu0 0
  %1543 = vmatpush1.bf16.msra.mxu0 %v1445
  %1544 = vmatprep.subr.bf16.mxu0 0
  %1545 = vmatpush1.bf16.msra.mxu0 %v1446
  %1546 = vmatprep.subr.bf16.mxu0 0
  %1547 = vmatpush1.bf16.msra.mxu0 %v1447
  %1548 = vmatprep.subr.bf16.mxu0 0
  %1549 = vmatpush1.bf16.msra.mxu0 %v1448
  %1550 = vmatprep.subr.bf16.mxu0 0
  %1551 = vmatpush1.bf16.msra.mxu0 %v1449
  %1552 = vmatprep.subr.bf16.mxu0 0
  %1553 = vmatpush1.bf16.msra.mxu0 %v1450
  %1554 = vmatprep.subr.bf16.mxu0 0
  %1555 = vmatpush1.bf16.msra.mxu0 %v1451
  %1556 = vmatprep.mubr.bf16.mxu0 %v1226
  %1557 = vmatmul.mubr.bf16.gmra.mrb[0].mxu0 %v1225
  %v1558 = vpop.f32.mrb[0].mxu0
  %v1559 = vadd.f32 %v1519, %v1558
  %v1560 = vpop.f32.mrb[0].mxu0
  %v1561 = vpop.f32.mrb[0].mxu0
  %v1562 = vpop.f32.mrb[0].mxu0
  %1563 = vdwg.mxu0
  %v1564 = vmax.f32 %v1559, 0.0
  %v1565 = vpack.c.bf16 %v1564, %v1564
  %v1566 = vld [vmem:[%s4] sm:$0xf]
  %v1567 = vld [vmem:[%s4 + $0x4] sm:$0xf]
  %v1568 = vld [vmem:[%s4 + $0x8] sm:$0xf]
  %v1569 = vld [vmem:[%s4 + $0xc] sm:$0xf]
  %v1570 = vld [vmem:[%s4 + $0x10] sm:$0xf]
  %v1571 = vld [vmem:[%s4 + $0x14] sm:$0xf]
  %v1572 = vld [vmem:[%s4 + $0x18] sm:$0xf]
  %v1573 = vld [vmem:[%s4 + $0x1c] sm:$0xf]
  %v1574 = vld [vmem:[%s4 + $0x20] sm:$0xf]
  %v1575 = vld [vmem:[%s4 + $0x24] sm:$0xf]
  %v1576 = vld [vmem:[%s4 + $0x28] sm:$0xf]
  %v1577 = vld [vmem:[%s4 + $0x2c] sm:$0xf]
  %v1578 = vld [vmem:[%s4 + $0x30] sm:$0xf]
  %v1579 = vld [vmem:[%s4 + $0x34] sm:$0xf]
  %v1580 = vld [vmem:[%s4 + $0x38] sm:$0xf]
  %v1581 = vld [vmem:[%s4 + $0x3c] sm:$0xf]
  %v1582 = vld [vmem:[%s5 + $0x3] ss:$0 sm:$0xff]
  %v1599 = vunpack.c.l.b16 %v1566
  %v1600 = vunpack.c.l.b16 %v1567
  %v1601 = vunpack.c.l.b16 %v1568
  %v1602 = vunpack.c.l.b16 %v1569
  %v1603 = vunpack.c.l.b16 %v1570
  %v1604 = vunpack.c.l.b16 %v1571
  %v1605 = vunpack.c.l.b16 %v1572
  %v1606 = vunpack.c.l.b16 %v1573
  %v1607 = vunpack.c.l.b16 %v1574
  %v1608 = vunpack.c.l.b16 %v1575
  %v1609 = vunpack.c.l.b16 %v1576
  %v1610 = vunpack.c.l.b16 %v1577
  %v1611 = vunpack.c.l.b16 %v1578
  %v1612 = vunpack.c.l.b16 %v1579
  %v1613 = vunpack.c.l.b16 %v1580
  %v1614 = vunpack.c.l.b16 %v1581
  %v1615 = vpack.c.b16 %v1600, %v1599
  %v1616 = vpack.c.b16 %v1602, %v1601
  %v1617 = vpack.c.b16 %v1604, %v1603
  %v1618 = vpack.c.b16 %v1606, %v1605
  %v1619 = vpack.c.b16 %v1608, %v1607
  %v1620 = vpack.c.b16 %v1610, %v1609
  %v1621 = vpack.c.b16 %v1612, %v1611
  %v1622 = vpack.c.b16 %v1614, %v1613
  %1631 = vmatprep.subr.bf16.mxu0 0
  %1632 = vmatpush1.bf16.msra.mxu0 %v1615
  %1633 = vmatprep.subr.bf16.mxu0 0
  %1634 = vmatpush1.bf16.msra.mxu0 %v1616
  %1635 = vmatprep.subr.bf16.mxu0 0
  %1636 = vmatpush1.bf16.msra.mxu0 %v1617
  %1637 = vmatprep.subr.bf16.mxu0 0
  %1638 = vmatpush1.bf16.msra.mxu0 %v1618
  %1639 = vmatprep.subr.bf16.mxu0 0
  %1640 = vmatpush1.bf16.msra.mxu0 %v1619
  %1641 = vmatprep.subr.bf16.mxu0 0
  %1642 = vmatpush1.bf16.msra.mxu0 %v1620
  %1643 = vmatprep.subr.bf16.mxu0 0
  %1644 = vmatpush1.bf16.msra.mxu0 %v1621
  %1645 = vmatprep.subr.bf16.mxu0 0
  %1646 = vmatpush1.bf16.msra.mxu0 %v1622
  %1647 = vmatprep.subr.bf16.mxu0 0
  %1648 = vmatpush1.bf16.msra.mxu0 0
  %1649 = vmatprep.subr.bf16.mxu0 0
  %1650 = vmatpush1.bf16.msra.mxu0 0
  %1651 = vmatprep.subr.bf16.mxu0 0
  %1652 = vmatpush1.bf16.msra.mxu0 0
  %1653 = vmatprep.subr.bf16.mxu0 0
  %1654 = vmatpush1.bf16.msra.mxu0 0
  %1655 = vmatprep.subr.bf16.mxu0 0
  %1656 = vmatpush1.bf16.msra.mxu0 0
  %1657 = vmatprep.subr.bf16.mxu0 0
  %1658 = vmatpush1.bf16.msra.mxu0 0
  %1659 = vmatprep.subr.bf16.mxu0 0
  %1660 = vmatpush1.bf16.msra.mxu0 0
  %1661 = vmatprep.subr.bf16.mxu0 0
  %1662 = vmatpush1.bf16.msra.mxu0 0
  %1663 = vmatprep.mubr.bf16.mxu0 0
  %1664 = vmatmul.mubr.bf16.gmra.mrb[0].mxu0 %v1565
  %v1665 = vpop.f32.mrb[0].mxu0
  %v1666 = vadd.f32 %v1582, %v1665
  %v1667 = vpop.f32.mrb[0].mxu0
  %v1668 = vpop.f32.mrb[0].mxu0
  %v1669 = vpop.f32.mrb[0].mxu0
  %1670 = vdwg.mxu0
  %1671 = vst [vmem:[%s6] sm:$0xff] %v1666
  // Predicated region
  $region26: #{a_call__.1} parent=0 // pred_check
    _
  $region27: #{a_call__.1} parent=0 // pred_check_branch
    %1673 = sbr.rel (0) target = $region29
  $region28: #{a_call__.1} parent=0 // pred_region
    _
  $region29: #{a_call__.1} parent=0 // pred_fallthru
    _
  // Predicated region
  $region30: #{a_call__.1} parent=0 // pred_check
    _
  $region31: #{a_call__.1} parent=0 // pred_check_branch
    %1675 = sbr.rel (0) target = $region33
  $region32: #{a_call__.1} parent=0 // pred_region
    _
  $region33: #{a_call__.1} parent=0 // pred_fallthru
    _

</llo_original>
